<compile_context>
chip_gen: v7x
topology: tpu7x:2x2x1
jax: 0.10.0
libtpu: 0.0.40
codegen_flags: <defaults>
</compile_context>

<pallas_src>
import functools
import math

import jax
import jax.numpy as jnp
from jax.experimental import pallas as pl
from jax.experimental.pallas import tpu as pltpu


_VMEM_LIMIT = 48 * 1024 * 1024  # headroom; < v7x 64 MiB physical, < v5e/v6e 128 MiB


# ----------------------------------------------------------------------------
# Tiling helpers
# ----------------------------------------------------------------------------
def _tile(dim, pref, align):
    """Largest tile <= pref that is a multiple of `align` and divides `dim`.

    Falls back to the full dim (always a legal block) when dim is small or has
    no aligned divisor.
    """
    if dim <= pref:
        return dim
    t = (pref // align) * align
    while t >= align:
        if dim % t == 0:
            return t
        t -= align
    return dim


def _parallel_tile(dim, pref, align):
    """Tile for a 'parallel' grid axis: cap so the axis yields >= 2 blocks when
    possible, so a v7x chip (2 TensorCores) never runs a single-block grid."""
    if dim >= 2 * align:
        half = (dim // 2 // align) * align
        if half >= align:
            pref = min(pref, half)
    return _tile(dim, pref, align)


def _mxu_tile(dim, pref=512):
    """Contraction / output-width tile: prefer 256-aligned (v6e/v7x MXU width),
    fall back to 128-aligned, else the full dim."""
    if dim % 256 == 0:
        return _tile(dim, pref, 256)
    return _tile(dim, pref, 128)


# ----------------------------------------------------------------------------
# Pallas kernels
# ----------------------------------------------------------------------------
def _matmul_kernel(x_ref, w_ref, b_ref, o_ref, acc_ref, *, act):
    """Tiled matmul, f32 accumulator; bias + optional GELU fused on finalize."""
    @pl.when(pl.program_id(2) == 0)
    def _():
        acc_ref[...] = jnp.zeros_like(acc_ref)

    acc_ref[...] += jnp.dot(x_ref[...], w_ref[...],
                            preferred_element_type=jnp.float32)

    @pl.when(pl.program_id(2) == pl.num_programs(2) - 1)
    def _():
        y = acc_ref[...] + b_ref[...].astype(jnp.float32)
        if act == "gelu":
            # TODO(synk): PyTorch nn.GELU default is exact erf; Mosaic-safe
            # tanh approximation used here.
            y = jax.nn.gelu(y)
        o_ref[...] = y.astype(o_ref.dtype)


def _matmul_ln_kernel(*refs, act, has_res, has_post, eps):
    """Matmul with fused epilogue: bias (+GELU) (+residual) + LayerNorm (+post-add).

    The full output row is resident in the f32 accumulator (tn = full width), so
    the residual-add + LN is VPU work under the store — no HBM round trip.
    """
    it = iter(refs)
    x_ref = next(it)
    w_ref = next(it)
    b_ref = next(it)
    r_ref = next(it) if has_res else None
    g_ref = next(it)
    bt_ref = next(it)
    p_ref = next(it) if has_post else None
    o_ref = next(it)
    acc_ref = next(it)

    @pl.when(pl.program_id(2) == 0)
    def _():
        acc_ref[...] = jnp.zeros_like(acc_ref)

    acc_ref[...] += jnp.dot(x_ref[...], w_ref[...],
                            preferred_element_type=jnp.float32)

    @pl.when(pl.program_id(2) == pl.num_programs(2) - 1)
    def _():
        y = acc_ref[...] + b_ref[...].astype(jnp.float32)
        if act == "gelu":
            y = jax.nn.gelu(y)
        if has_res:
            y = y + r_ref[...].astype(jnp.float32)
        mu = jnp.mean(y, axis=-1, keepdims=True)
        yc = y - mu
        var = jnp.mean(yc * yc, axis=-1, keepdims=True)
        y = yc * jax.lax.rsqrt(var + eps) * g_ref[...].astype(jnp.float32)
        y = y + bt_ref[...].astype(jnp.float32)
        if has_post:
            y = y + p_ref[...].astype(jnp.float32)
        o_ref[...] = y.astype(o_ref.dtype)


def _layernorm_kernel(x_ref, g_ref, b_ref, o_ref, *, eps):
    """Standalone LayerNorm (f32 statistics)."""
    x = x_ref[...].astype(jnp.float32)
    mu = jnp.mean(x, axis=-1, keepdims=True)
    xc = x - mu
    var = jnp.mean(xc * xc, axis=-1, keepdims=True)
    y = xc * jax.lax.rsqrt(var + eps) * g_ref[...].astype(jnp.float32)
    y = y + b_ref[...].astype(jnp.float32)
    o_ref[...] = y.astype(o_ref.dtype)


def _flash_attn_kernel(q_ref, k_ref, v_ref, o_ref, m_sc, l_sc, acc_sc):
    """Flash attention over one head: online softmax, f32 m/l/acc scratch.

    The 1/sqrt(head_dim) scale is folded into the Q projection weights, so no
    score-tile multiply here.
    """
    ki = pl.program_id(2)

    @pl.when(ki == 0)
    def _():
        m_sc[...] = jnp.full_like(m_sc, -jnp.inf)
        l_sc[...] = jnp.zeros_like(l_sc)
        acc_sc[...] = jnp.zeros_like(acc_sc)

    q = q_ref[...]                       # (tq, dh) bf16
    k = k_ref[...]                       # (tk, dh) bf16
    # q @ k^T without materializing a transpose.
    s = jax.lax.dot_general(q, k, (((1,), (1,)), ((), ())),
                            preferred_element_type=jnp.float32)
    m_new = jnp.maximum(m_sc[...], jnp.max(s, axis=-1, keepdims=True))
    alpha = jnp.exp(m_sc[...] - m_new)
    p = jnp.exp(s - m_new)
    l_sc[...] = alpha * l_sc[...] + jnp.sum(p, axis=-1, keepdims=True)
    acc_sc[...] = alpha * acc_sc[...] + jnp.dot(
        p.astype(v_ref.dtype), v_ref[...], preferred_element_type=jnp.float32)
    m_sc[...] = m_new

    @pl.when(ki == pl.num_programs(2) - 1)
    def _():
        o_ref[...] = (acc_sc[...] *
                      pl.reciprocal(l_sc[...], approx=True)).astype(o_ref.dtype)


def _mse_kernel(pred_ref, tgt_ref, o_ref, acc_ref, *, denom):
    """Tiled MSE: lane-partial (1, D) VMEM accumulator, scalar reduce on last step."""
    @pl.when(pl.program_id(0) == 0)
    def _():
        acc_ref[...] = jnp.zeros_like(acc_ref)

    d = pred_ref[...].astype(jnp.float32) - tgt_ref[...].astype(jnp.float32)
    acc_ref[...] += jnp.sum(d * d, axis=0, keepdims=True)

    @pl.when(pl.program_id(0) == pl.num_programs(0) - 1)
    def _():
        o_ref[0, 0] = jnp.sum(acc_ref[...]) / denom


def _kl_kernel(mu_ref, lv_ref, o_ref, acc_ref, *, denom):
    """Tiled VAE KL: lane-partial (1, D) VMEM accumulator, scalar reduce at end."""
    @pl.when(pl.program_id(0) == 0)
    def _():
        acc_ref[...] = jnp.zeros_like(acc_ref)

    mu = mu_ref[...].astype(jnp.float32)
    lv = lv_ref[...].astype(jnp.float32)
    kl = -0.5 * (1.0 + lv - mu * mu - jnp.exp(lv))
    acc_ref[...] += jnp.sum(kl, axis=0, keepdims=True)

    @pl.when(pl.program_id(0) == pl.num_programs(0) - 1)
    def _():
        o_ref[0, 0] = jnp.sum(acc_ref[...]) / denom


# ----------------------------------------------------------------------------
# Pallas wrappers
# ----------------------------------------------------------------------------
def pallas_linear(x, w, b, act=None, out_dtype=jnp.bfloat16,
                  ln=None, residual=None, post_add=None, ln_eps=1e-5):
    """y = act(x @ w + b); if ln=(gamma, beta) is given the LayerNorm (with
    optional residual pre-add and post-add) is fused into the matmul finalize."""
    if x.dtype != jnp.bfloat16:
        x = x.astype(jnp.bfloat16)
    if w.dtype != jnp.bfloat16:
        w = w.astype(jnp.bfloat16)
    m, k = x.shape
    k2, n = w.shape
    assert k == k2
    fuse_ln = ln is not None

    tk = _mxu_tile(k)
    if fuse_ln:
        tn = n  # full output row must be resident for the LayerNorm epilogue
        # Keep the f32 accumulator (plus double-buffered ins/outs) far under the
        # 16/32 MiB scoped-VMEM defaults (and v7x's 64 MiB physical VMEM).
        row_pref = max(8, min(512, ((6 << 20) // (n * 4)) // 8 * 8))
    else:
        tn = _mxu_tile(n)
        row_pref = 512
    tm = _parallel_tile(m, row_pref, 8)
    grid = (m // tm, n // tn, k // tk)

    x_spec = pl.BlockSpec((tm, tk), lambda i, j, kk: (i, kk))
    w_spec = pl.BlockSpec((tk, tn), lambda i, j, kk: (kk, j))
    b_spec = pl.BlockSpec((1, tn), lambda i, j, kk: (0, j))
    out_spec = pl.BlockSpec((tm, tn), lambda i, j, kk: (i, j))

    cp = pltpu.CompilerParams(
        dimension_semantics=("parallel", "parallel", "arbitrary"),
        vmem_limit_bytes=_VMEM_LIMIT)

    if not fuse_ln:
        return pl.pallas_call(
            functools.partial(_matmul_kernel, act=act),
            out_shape=jax.ShapeDtypeStruct((m, n), out_dtype),
            grid=grid,
            in_specs=[x_spec, w_spec, b_spec],
            out_specs=out_spec,
            scratch_shapes=[pltpu.VMEM((tm, tn), jnp.float32)],
            compiler_params=cp,
        )(x, w, b)

    gamma, beta = ln
    row_spec = pl.BlockSpec((tm, n), lambda i, j, kk: (i, 0))
    vec_spec = pl.BlockSpec((1, n), lambda i, j, kk: (0, 0))

    args = [x, w, b]
    in_specs = [x_spec, w_spec, b_spec]
    if residual is not None:
        args.append(residual)
        in_specs.append(row_spec)
    args += [gamma, beta]
    in_specs += [vec_spec, vec_spec]
    if post_add is not None:
        args.append(post_add)
        in_specs.append(row_spec)

    return pl.pallas_call(
        functools.partial(_matmul_ln_kernel, act=act,
                          has_res=residual is not None,
                          has_post=post_add is not None, eps=ln_eps),
        out_shape=jax.ShapeDtypeStruct((m, n), out_dtype),
        grid=grid,
        in_specs=in_specs,
        out_specs=out_spec,
        scratch_shapes=[pltpu.VMEM((tm, tn), jnp.float32)],
        compiler_params=cp,
    )(*args)


def pallas_layernorm(x, gamma, beta, eps=1e-5, out_dtype=jnp.bfloat16):
    m, d = x.shape
    tm = _parallel_tile(m, 1024, 8)
    grid = (m // tm,)
    return pl.pallas_call(
        functools.partial(_layernorm_kernel, eps=eps),
        out_shape=jax.ShapeDtypeStruct((m, d), out_dtype),
        grid=grid,
        in_specs=[pl.BlockSpec((tm, d), lambda i: (i, 0)),
                  pl.BlockSpec((1, d), lambda i: (0, 0)),
                  pl.BlockSpec((1, d), lambda i: (0, 0))],
        out_specs=pl.BlockSpec((tm, d), lambda i: (i, 0)),
        compiler_params=pltpu.CompilerParams(dimension_semantics=("parallel",)),
    )(x, gamma, beta)


def pallas_mha(qkv, heads):
    """Multi-head attention reading the fused (N, 3*D) QKV activation directly.

    Per-head Q/K/V tiles are addressed purely through BlockSpec column indexing,
    and the output is written back already in (N, D) head-concatenated layout.
    """
    n, d3 = qkv.shape
    d = d3 // 3
    dh = d // heads
    assert dh % 128 == 0, "head_dim must be a multiple of 128 for lane-dense tiles"
    tq = _parallel_tile(n, 256, 8)
    tk = _tile(n, 512, 128)
    return pl.pallas_call(
        _flash_attn_kernel,
        out_shape=jax.ShapeDtypeStruct((n, d), qkv.dtype),
        grid=(heads, n // tq, n // tk),
        in_specs=[
            pl.BlockSpec((tq, dh), lambda h, qi, ki: (qi, h)),
            pl.BlockSpec((tk, dh), lambda h, qi, ki: (ki, heads + h)),
            pl.BlockSpec((tk, dh), lambda h, qi, ki: (ki, 2 * heads + h)),
        ],
        out_specs=pl.BlockSpec((tq, dh), lambda h, qi, ki: (qi, h)),
        scratch_shapes=[
            pltpu.VMEM((tq, 1), jnp.float32),   # running max
            pltpu.VMEM((tq, 1), jnp.float32),   # running sum
            pltpu.VMEM((tq, dh), jnp.float32),  # output accumulator
        ],
        compiler_params=pltpu.CompilerParams(
            dimension_semantics=("parallel", "parallel", "arbitrary"),
            vmem_limit_bytes=_VMEM_LIMIT),
    )(qkv, qkv, qkv)


def pallas_mse(pred, tgt):
    m, d = pred.shape
    tm = _tile(m, 512, 8)
    out = pl.pallas_call(
        functools.partial(_mse_kernel, denom=float(m * d)),
        out_shape=jax.ShapeDtypeStruct((1, 1), jnp.float32),
        grid=(m // tm,),
        in_specs=[pl.BlockSpec((tm, d), lambda i: (i, 0)),
                  pl.BlockSpec((tm, d), lambda i: (i, 0))],
        out_specs=pl.BlockSpec(memory_space=pltpu.MemorySpace.SMEM),
        scratch_shapes=[pltpu.VMEM((1, d), jnp.float32)],
        compiler_params=pltpu.CompilerParams(dimension_semantics=("arbitrary",)),
    )(pred, tgt)
    return out[0, 0]


def pallas_kl(mu, logvar):
    m, d = mu.shape
    tm = _tile(m, 512, 8)
    out = pl.pallas_call(
        functools.partial(_kl_kernel, denom=float(m)),
        out_shape=jax.ShapeDtypeStruct((1, 1), jnp.float32),
        grid=(m // tm,),
        in_specs=[pl.BlockSpec((tm, d), lambda i: (i, 0)),
                  pl.BlockSpec((tm, d), lambda i: (i, 0))],
        out_specs=pl.BlockSpec(memory_space=pltpu.MemorySpace.SMEM),
        scratch_shapes=[pltpu.VMEM((1, d), jnp.float32)],
        compiler_params=pltpu.CompilerParams(dimension_semantics=("arbitrary",)),
    )(mu, logvar)
    return out[0, 0]


# ----------------------------------------------------------------------------
# Parameter construction (deterministic, synthetic)
# ----------------------------------------------------------------------------
def _dense_params(key, din, dout, scale=0.02):
    kw, _ = jax.random.split(key)
    w = (scale * jax.random.normal(kw, (din, dout), jnp.float32)).astype(jnp.bfloat16)
    b = jnp.zeros((1, dout), jnp.float32)
    return {"w": w, "b": b}


def _ln_params(d):
    return {"g": jnp.ones((1, d), jnp.float32), "b": jnp.zeros((1, d), jnp.float32)}


def init_omicsformer_params(key, *, n_genes, enc_hid, enc_layers, enc_head,
                            post_latent_dim, dec_hid, dec_layers, out_dim):
    keys = jax.random.split(key, 64)
    ki = iter(range(64))
    p = {}
    # Embedder (OmicsEmbeddingLayer): gene embedding matmul + norm.
    p["embed"] = _dense_params(keys[next(ki)], n_genes, enc_hid)
    p["embed_ln"] = _ln_params(enc_hid)
    # Transformer encoder layers (fused QKV weight per layer).
    dh = enc_hid // enc_head
    q_scale = 1.0 / math.sqrt(dh)
    p["enc"] = []
    for _ in range(enc_layers):
        wqkv = _dense_params(keys[next(ki)], enc_hid, 3 * enc_hid)
        # Fold the 1/sqrt(head_dim) softmax scale into the Q projection so the
        # flash-attention kernel never multiplies the (tq, tk) score tile.
        wq = (wqkv["w"][:, :enc_hid].astype(jnp.float32) * q_scale).astype(jnp.bfloat16)
        wqkv["w"] = jnp.concatenate([wq, wqkv["w"][:, enc_hid:]], axis=1)
        wqkv["b"] = wqkv["b"].at[:, :enc_hid].multiply(q_scale)
        layer = {
            "wqkv": wqkv,
            "wo": _dense_params(keys[next(ki)], enc_hid, enc_hid),
            "ln1": _ln_params(enc_hid),
            "ffn1": _dense_params(keys[next(ki)], enc_hid, 4 * enc_hid),
            "ffn2": _dense_params(keys[next(ki)], 4 * enc_hid, enc_hid),
            "ln2": _ln_params(enc_hid),
        }
        p["enc"].append(layer)
    # Pre-latent norm ('ln' branch).
    p["pre_latent_ln"] = _ln_params(enc_hid)
    # VAE latent: fused mu/logvar head (one (D, 2*latent) matmul).
    mu_p = _dense_params(keys[next(ki)], enc_hid, post_latent_dim)
    lv_p = _dense_params(keys[next(ki)], enc_hid, post_latent_dim)
    p["vae_head"] = {"w": jnp.concatenate([mu_p["w"], lv_p["w"]], axis=1),
                     "b": jnp.concatenate([mu_p["b"], lv_p["b"]], axis=1)}
    # Decoder MLP.
    p["dec"] = []
    dims = [post_latent_dim] + [dec_hid] * (dec_layers - 1) + [out_dim]
    for li in range(len(dims) - 1):
        p["dec"].append(_dense_params(keys[next(ki)], dims[li], dims[li + 1]))
    p["enc_head"] = enc_head
    p["post_latent_dim"] = post_latent_dim
    return p


def sinusoidal_pe(n, d):
    pos = jnp.arange(n, dtype=jnp.float32)[:, None]
    i = jnp.arange(d, dtype=jnp.float32)[None, :]
    angle = pos / jnp.power(10000.0, (2.0 * jnp.floor(i / 2.0)) / d)
    pe = jnp.where((jnp.arange(d) % 2) == 0, jnp.sin(angle), jnp.cos(angle))
    return pe.astype(jnp.float32)


# ----------------------------------------------------------------------------
# Forward pass (eval semantics of OmicsFormer.forward)
# ----------------------------------------------------------------------------
def omicsformer_forward(params, x, pe=None):
    # TODO(synk): MaskBuilder (mask_type='input') and dropout are train-time
    # stochastic ops; skipped in this eval-mode forward.
    n, _ = x.shape
    enc_hid = params["embed"]["w"].shape[1]
    heads = params["enc_head"]
    latent_dim = params["post_latent_dim"]

    # TODO(synk): cat_pe=True concatenates the PE before a projection; additive
    # PE (fused into the embed kernel's epilogue) is the simplified equivalent.
    if pe is None:
        pe = sinusoidal_pe(n, enc_hid)

    # Single wrapper-side cast: all kernels DMA bf16 activations thereafter.
    x_bf16 = x.astype(jnp.bfloat16)

    # --- Embedder: gene-emb matmul + GELU + LayerNorm + PE, fused in one kernel.
    h = pallas_linear(x_bf16, params["embed"]["w"], params["embed"]["b"],
                      act="gelu",
                      ln=(params["embed_ln"]["g"], params["embed_ln"]["b"]),
                      post_add=pe)

    # --- Transformer encoder over cells (post-LN residual blocks).
    for layer in params["enc"]:
        qkv = pallas_linear(h, layer["wqkv"]["w"], layer["wqkv"]["b"])   # (N, 3D)
        attn = pallas_mha(qkv, heads)                                    # (N, D)
        # Wo projection with residual-add + LayerNorm fused into the finalize.
        h = pallas_linear(attn, layer["wo"]["w"], layer["wo"]["b"],
                          ln=(layer["ln1"]["g"], layer["ln1"]["b"]),
                          residual=h)                                    # LN(h+attn)
        ff = pallas_linear(h, layer["ffn1"]["w"], layer["ffn1"]["b"], act="gelu")
        # FFN2 with residual-add + LayerNorm fused into the finalize.
        h = pallas_linear(ff, layer["ffn2"]["w"], layer["ffn2"]["b"],
                          ln=(layer["ln2"]["g"], layer["ln2"]["b"]),
                          residual=h)                                    # LN(h+ff)

    # --- pre_latent_norm ('ln').
    h = pallas_layernorm(h, params["pre_latent_ln"]["g"], params["pre_latent_ln"]["b"])

    # --- VAE latent layer: fused mu/logvar head, z = mu at eval, KL latent loss.
    mu_lv = pallas_linear(h, params["vae_head"]["w"], params["vae_head"]["b"],
                          out_dtype=jnp.float32)
    mu = mu_lv[:, :latent_dim]
    logvar = mu_lv[:, latent_dim:]
    z = mu
    # TODO(synk): reference may apply a kl_weight/beta to the KL term; added
    # unweighted here as in the reference forward (loss = latent_loss + obj).
    latent_loss = pallas_kl(mu, logvar)

    # --- Decoder MLP -> reconstruction.
    d = z
    n_dec = len(params["dec"])
    for li, layer in enumerate(params["dec"]):
        last = li == n_dec - 1
        d = pallas_linear(d, layer["w"], layer["b"],
                          act=None if last else "gelu",
                          out_dtype=jnp.float32 if last else jnp.bfloat16)
    recon = d

    # --- Objective: 'recon' (MSE) + latent loss.
    target_loss = pallas_mse(recon, x)
    loss = latent_loss + target_loss

    out_dict = {
        "recon": recon,
        "latent": z,
        "latent_loss": latent_loss,
        "target_loss": target_loss,
    }
    return out_dict, loss


# ----------------------------------------------------------------------------
# Demo
# ----------------------------------------------------------------------------
if __name__ == "__main__":
    # Small but lane-dense shapes (all feature dims are multiples of 128 so
    # every store is unmasked; head_dim = 128 for lane-dense attention tiles).
    N_CELLS = 128       # number of cells ("sequence" length)
    N_GENES = 256       # len(gene_list)
    ENC_HID = 256
    ENC_LAYERS = 2
    ENC_HEAD = 2        # head_dim = 128
    POST_LATENT = 128
    DEC_HID = 256
    DEC_LAYERS = 2
    OUT_DIM = N_GENES   # reconstruct expression

    key = jax.random.PRNGKey(0)
    kx, kp = jax.random.split(key)
    # Synthetic (log-normalized) expression matrix.
    x = jnp.abs(jax.random.normal(kx, (N_CELLS, N_GENES), jnp.float32))

    params = init_omicsformer_params(
        kp,
        n_genes=N_GENES,
        enc_hid=ENC_HID,
        enc_layers=ENC_LAYERS,
        enc_head=ENC_HEAD,
        post_latent_dim=POST_LATENT,
        dec_hid=DEC_HID,
        dec_layers=DEC_LAYERS,
        out_dim=OUT_DIM,
    )

    pe = sinusoidal_pe(N_CELLS, ENC_HID)   # hoisted: computed once
    out_dict, loss = omicsformer_forward(params, x, pe=pe)
    jax.block_until_ready(loss)
    jax.block_until_ready(out_dict["recon"])

    assert out_dict["recon"].shape == (N_CELLS, OUT_DIM)
    assert out_dict["latent"].shape == (N_CELLS, POST_LATENT)
    assert jnp.isfinite(loss)
    print("KERNEL_OK")
</pallas_src>

<mosaic_0001>
module attributes {stable_mosaic.version = 11 : i64} {
  func.func @_matmul_ln_kernel(%arg0: i32, %arg1: i32, %arg2: i32, %arg3: memref<64x256xbf16, #tpu.memory_space<vmem>>, %arg4: memref<256x256xbf16, #tpu.memory_space<vmem>>, %arg5: memref<1x256xf32, #tpu.memory_space<vmem>>, %arg6: memref<1x256xf32, #tpu.memory_space<vmem>>, %arg7: memref<1x256xf32, #tpu.memory_space<vmem>>, %arg8: memref<64x256xf32, #tpu.memory_space<vmem>>, %arg9: memref<64x256xbf16, #tpu.memory_space<vmem>>, %arg10: memref<64x256xf32, #tpu.memory_space<vmem>>) attributes {dimension_semantics = [#tpu.dimension_semantics<parallel>, #tpu.dimension_semantics<parallel>, #tpu.dimension_semantics<arbitrary>], iteration_bounds = array<i64: 2, 1, 1>, scalar_prefetch = 0 : i64, scratch_operands = 1 : i64, tpu.core_type = #tpu.core_type<tc>, window_params = [{transform_indices = @transform_0, window_bounds = array<i64: 64, 256>}, {transform_indices = @transform_1, window_bounds = array<i64: 256, 256>}, {transform_indices = @transform_2, window_bounds = array<i64: 1, 256>}, {pipeline_mode = #tpu.pipeline_mode<synchronous>, transform_indices = @transform_3, window_bounds = array<i64: 1, 256>}, {pipeline_mode = #tpu.pipeline_mode<synchronous>, transform_indices = @transform_4, window_bounds = array<i64: 1, 256>}, {transform_indices = @transform_5, window_bounds = array<i64: 64, 256>}, {transform_indices = @transform_6, window_bounds = array<i64: 64, 256>}]} {
    %c0_i32 = arith.constant 0 : i32
    %0 = arith.cmpi eq, %arg2, %c0_i32 : i32
    %1 = arith.extui %0 : i1 to i32
    %c0_i32_0 = arith.constant 0 : i32
    %2 = arith.cmpi ne, %1, %c0_i32_0 : i32
    scf.if %2 {
      %cst_10 = arith.constant 0.000000e+00 : f32
      %12 = vector.broadcast %cst_10 : f32 to vector<64x256xf32>
      %c0_11 = arith.constant 0 : index
      %c0_12 = arith.constant 0 : index
      %13 = vector.load %arg10[%c0_11, %c0_12] : memref<64x256xf32, #tpu.memory_space<vmem>>, vector<64x256xf32>
      tpu.vector_store %arg10[%c0_11, %c0_12], %12 {strides = array<i32>} : memref<64x256xf32, #tpu.memory_space<vmem>>, vector<64x256xf32>,
    } else {
    }
    %c0 = arith.constant 0 : index
    %c0_1 = arith.constant 0 : index
    %3 = vector.load %arg10[%c0, %c0_1] : memref<64x256xf32, #tpu.memory_space<vmem>>, vector<64x256xf32>
    %c0_2 = arith.constant 0 : index
    %c0_3 = arith.constant 0 : index
    %4 = vector.load %arg3[%c0_2, %c0_3] : memref<64x256xbf16, #tpu.memory_space<vmem>>, vector<64x256xbf16>
    %c0_4 = arith.constant 0 : index
    %c0_5 = arith.constant 0 : index
    %5 = vector.load %arg4[%c0_4, %c0_5] : memref<256x256xbf16, #tpu.memory_space<vmem>>, vector<256x256xbf16>
    %cst = arith.constant dense<0.000000e+00> : vector<64x256xf32>
    %6 = tpu.matmul %4, %5, %cst {dimension_numbers = #tpu.dot_dimension_numbers<[1], [0], [0], [1], [0, 0, 1, 1], [], []>} : vector<64x256xbf16>, vector<256x256xbf16>, vector<64x256xf32> -> vector<64x256xf32>
    %7 = arith.addf %3, %6 : vector<64x256xf32>
    %c0_6 = arith.constant 0 : index
    %c0_7 = arith.constant 0 : index
    %8 = vector.load %arg10[%c0_6, %c0_7] : memref<64x256xf32, #tpu.memory_space<vmem>>, vector<64x256xf32>
    tpu.vector_store %arg10[%c0_6, %c0_7], %7 {strides = array<i32>} : memref<64x256xf32, #tpu.memory_space<vmem>>, vector<64x256xf32>,
    %c0_i32_8 = arith.constant 0 : i32
    %9 = arith.cmpi eq, %arg2, %c0_i32_8 : i32
    %10 = arith.extui %9 : i1 to i32
    %c0_i32_9 = arith.constant 0 : i32
    %11 = arith.cmpi ne, %10, %c0_i32_9 : i32
    scf.if %11 {
      %c0_10 = arith.constant 0 : index
      %c0_11 = arith.constant 0 : index
      %12 = vector.load %arg10[%c0_10, %c0_11] : memref<64x256xf32, #tpu.memory_space<vmem>>, vector<64x256xf32>
      %c0_12 = arith.constant 0 : index
      %c0_13 = arith.constant 0 : index
      %13 = vector.load %arg5[%c0_12, %c0_13] : memref<1x256xf32, #tpu.memory_space<vmem>>, vector<1x256xf32>
      %14 = vector.broadcast %13 : vector<1x256xf32> to vector<64x256xf32>
      %15 = arith.addf %12, %14 : vector<64x256xf32>
      %16 = arith.mulf %15, %15 : vector<64x256xf32>
      %17 = arith.mulf %15, %16 : vector<64x256xf32>
      %cst_14 = arith.constant 4.471500e-02 : f32
      %18 = vector.broadcast %cst_14 : f32 to vector<64x256xf32>
      %19 = arith.mulf %18, %17 : vector<64x256xf32>
      %20 = arith.addf %15, %19 : vector<64x256xf32>
      %cst_15 = arith.constant 0.797884583 : f32
      %21 = vector.broadcast %cst_15 : f32 to vector<64x256xf32>
      %22 = arith.mulf %21, %20 : vector<64x256xf32>
      %23 = math.tanh %22 : vector<64x256xf32>
      %cst_16 = arith.constant 1.000000e+00 : f32
      %24 = vector.broadcast %cst_16 : f32 to vector<64x256xf32>
      %25 = arith.addf %24, %23 : vector<64x256xf32>
      %cst_17 = arith.constant 5.000000e-01 : f32
      %26 = vector.broadcast %cst_17 : f32 to vector<64x256xf32>
      %27 = arith.mulf %26, %25 : vector<64x256xf32>
      %28 = arith.mulf %15, %27 : vector<64x256xf32>
      %cst_18 = arith.constant dense<0.000000e+00> : vector<64xf32>
      %29 = vector.multi_reduction <add>, %28, %cst_18 [1] : vector<64x256xf32> to vector<64xf32>
      %30 = vector.shape_cast %29 : vector<64xf32> to vector<64x1xf32>
      %cst_19 = arith.constant 2.560000e+02 : f32
      %31 = vector.broadcast %cst_19 : f32 to vector<64x1xf32>
      %32 = arith.divf %30, %31 : vector<64x1xf32>
      %33 = vector.broadcast %32 : vector<64x1xf32> to vector<64x256xf32>
      %34 = arith.subf %28, %33 : vector<64x256xf32>
      %35 = arith.mulf %34, %34 : vector<64x256xf32>
      %cst_20 = arith.constant dense<0.000000e+00> : vector<64xf32>
      %36 = vector.multi_reduction <add>, %35, %cst_20 [1] : vector<64x256xf32> to vector<64xf32>
      %37 = vector.shape_cast %36 : vector<64xf32> to vector<64x1xf32>
      %cst_21 = arith.constant 2.560000e+02 : f32
      %38 = vector.broadcast %cst_21 : f32 to vector<64x1xf32>
      %39 = arith.divf %37, %38 : vector<64x1xf32>
      %cst_22 = arith.constant 9.99999974E-6 : f32
      %40 = vector.broadcast %cst_22 : f32 to vector<64x1xf32>
      %41 = arith.addf %39, %40 : vector<64x1xf32>
      %42 = math.rsqrt %41 : vector<64x1xf32>
      %43 = vector.broadcast %42 : vector<64x1xf32> to vector<64x256xf32>
      %44 = arith.mulf %34, %43 : vector<64x256xf32>
      %c0_23 = arith.constant 0 : index
      %c0_24 = arith.constant 0 : index
      %45 = vector.load %arg6[%c0_23, %c0_24] : memref<1x256xf32, #tpu.memory_space<vmem>>, vector<1x256xf32>
      %46 = vector.broadcast %45 : vector<1x256xf32> to vector<64x256xf32>
      %47 = arith.mulf %44, %46 : vector<64x256xf32>
      %c0_25 = arith.constant 0 : index
      %c0_26 = arith.constant 0 : index
      %48 = vector.load %arg7[%c0_25, %c0_26] : memref<1x256xf32, #tpu.memory_space<vmem>>, vector<1x256xf32>
      %49 = vector.broadcast %48 : vector<1x256xf32> to vector<64x256xf32>
      %50 = arith.addf %47, %49 : vector<64x256xf32>
      %c0_27 = arith.constant 0 : index
      %c0_28 = arith.constant 0 : index
      %51 = vector.load %arg8[%c0_27, %c0_28] : memref<64x256xf32, #tpu.memory_space<vmem>>, vector<64x256xf32>
      %52 = arith.addf %50, %51 : vector<64x256xf32>
      %53 = arith.truncf %52 : vector<64x256xf32> to vector<64x256xbf16>
      %c0_29 = arith.constant 0 : index
      %c0_30 = arith.constant 0 : index
      %54 = vector.load %arg9[%c0_29, %c0_30] : memref<64x256xbf16, #tpu.memory_space<vmem>>, vector<64x256xbf16>
      tpu.vector_store %arg9[%c0_29, %c0_30], %53 {strides = array<i32>} : memref<64x256xbf16, #tpu.memory_space<vmem>>, vector<64x256xbf16>,
    } else {
    }
    return
  }
  func.func @transform_0(%arg0: i32, %arg1: i32, %arg2: i32) -> (i32, i32) {
    %c0_i32 = arith.constant 0 : i32
    return %arg0, %arg2 : i32, i32
  }
  func.func @transform_1(%arg0: i32, %arg1: i32, %arg2: i32) -> (i32, i32) {
    %c0_i32 = arith.constant 0 : i32
    return %arg2, %arg1 : i32, i32
  }
  func.func @transform_2(%arg0: i32, %arg1: i32, %arg2: i32) -> (i32, i32) {
    %c0_i32 = arith.constant 0 : i32
    %c0_i32_0 = arith.constant 0 : i32
    return %c0_i32, %arg1 : i32, i32
  }
  func.func @transform_3(%arg0: i32, %arg1: i32, %arg2: i32) -> (i32, i32) {
    %c0_i32 = arith.constant 0 : i32
    %c0_i32_0 = arith.constant 0 : i32
    %c0_i32_1 = arith.constant 0 : i32
    return %c0_i32, %c0_i32_0 : i32, i32
  }
  func.func @transform_4(%arg0: i32, %arg1: i32, %arg2: i32) -> (i32, i32) {
    %c0_i32 = arith.constant 0 : i32
    %c0_i32_0 = arith.constant 0 : i32
    %c0_i32_1 = arith.constant 0 : i32
    return %c0_i32, %c0_i32_0 : i32, i32
  }
  func.func @transform_5(%arg0: i32, %arg1: i32, %arg2: i32) -> (i32, i32) {
    %c0_i32 = arith.constant 0 : i32
    %c0_i32_0 = arith.constant 0 : i32
    return %arg0, %c0_i32 : i32, i32
  }
  func.func @transform_6(%arg0: i32, %arg1: i32, %arg2: i32) -> (i32, i32) {
    %c0_i32 = arith.constant 0 : i32
    return %arg0, %arg1 : i32, i32
  }
}

</mosaic_0001>

<llo_original>
// kernel: tpu_custom_call.1
$region0: #{tpu_custom_call.1}
  #allocation0 [shape = 'u32[]', space=smem, size = 0x4, offset = 0x4, fixed_abs, tag = 'smem constant byte address 0x4 - core index']
  #allocation1 [shape = 'u32[144,128]{1,0:T(1,128)}', space=vmem, size = 0x12000, scoped, tag = 'internal scratch']
  #allocation2 [shape = 'f32[64,256]{1,0:T(8,128)}', space=vmem, size = 0x10000, scoped, tag = 'scratch operand']
  %s0 = inlined_call_operand.hbm [shape: bf16[128,256], index: 0, kind: input, shape index: {}]
  %s1 = inlined_call_operand.hbm [shape: bf16[256,256], index: 1, kind: input, shape index: {}]
  %s2 = inlined_call_operand.vmem [shape: f32[1,256], index: 2, kind: input, shape index: {}]
  %s3 = inlined_call_operand.vmem [shape: f32[1,256], index: 3, kind: input, shape index: {}]
  %s4 = inlined_call_operand.vmem [shape: f32[1,256], index: 4, kind: input, shape index: {}]
  %s5 = inlined_call_operand.hbm [shape: f32[128,256], index: 5, kind: input, shape index: {}]
  %s6 = inlined_call_operand.hbm [shape: bf16[128,256], index: 6, kind: output, shape index: {}]
  %s7 = sld [smem:[#allocation0]]
  $region77: #{tpu_custom_call.1} parent=0
    _
  %s9 = ssub.s32 1, %s7
  %s10 = scalar_select 0, %s9, %s7
  $region1: #{tpu_custom_call.1} parent=0
    #allocation3 [shape = 'u8[65536]{0}', space=vmem, size = 0x10000, scoped, tag = 'input window, operand 0']
    #allocation4 [shape = 's32[2]{0}', space=sflag, size = 0x8, scoped, tag = 'scoped memory for tpu_custom_call.1']
    #allocation5 [shape = 's32[2]{0}', space=sflag, size = 0x8, scoped, tag = 'scoped memory for tpu_custom_call.1']
    #allocation6 [shape = 'u8[131072]{0}', space=vmem, size = 0x20000, scoped, tag = 'input window, operand 1, single buffered']
    #allocation7 [shape = 's32[1]{0}', space=sflag, size = 0x4, scoped, tag = 'scoped memory for tpu_custom_call.1']
    #allocation8 [shape = 'u8[131072]{0}', space=vmem, size = 0x20000, scoped, tag = 'input window, operand 5']
    #allocation9 [shape = 'u8[65536]{0}', space=vmem, size = 0x10000, scoped, tag = 'output window, operand 0']
    %11 = vsyncpa [#allocation4], 0
    %s12 = scalar_lea.sflag [#allocation4], 1
    %13 = vsyncpa %s12, 0
    %14 = vsyncpa [#allocation7], 0
    %15 = vsyncpa [#allocation5], 0
    %s16 = scalar_lea.sflag [#allocation5], 1
    %17 = vsyncpa %s16, 0
    loop: start=0, step=1, limit=4
    $region2: #{tpu_custom_call.1} parent=1 // loop_pre_header
      _
    $region3: #{tpu_custom_call.1} parent=1 // loop_header
      %s19 = sphi 0, %s23
      %p20 = scmp.ge.s32.totalorder %s19, 4
      %s26 = sphi 0, %s45
      %s27 = sphi 0, %s41
      %s28 = sphi 0, %s37
      %s29 = sphi 0, %s26
      %s30 = sphi 0, %s27
      %s31 = sphi 0, %s28
      %s32 = sphi 0, %s29
      %s33 = sphi 0, %s30
      %s34 = sphi 0, %s31
      %s50 = sphi 0, %s52
      %s53 = sphi 0, %s50
      %s54 = sphi 0, %s53
      %s70 = sphi 0, %s54
      %s78 = sphi 0, %s80
      %s81 = sphi 0, %s78
      %s82 = sphi 0, %s81
      %s98 = sphi 0, %s82
      %s104 = sphi 0, %s106
      %s107 = sphi 0, %s104
      %s108 = sphi 0, %s107
      %s124 = sphi 0, %s108
      %s128 = sphi 0, %s128
      %s130 = sphi 0, %s128
      %s131 = sphi 0, %s130
      %s145 = sphi 0, %s131
      %s149 = sphi 0, %s149
      %s151 = sphi 0, %s149
      %s152 = sphi 0, %s151
      %s166 = sphi 0, %s152
      %s172 = sphi 0, %s174
      %s175 = sphi 0, %s172
      %s176 = sphi 0, %s175
      %s192 = sphi 0, %s176
      %s200 = sphi 0, %s202
      %s203 = sphi 0, %s200
      %s204 = sphi 0, %s203
      %s220 = sphi 0, %s204
    $region4: #{tpu_custom_call.1} parent=1 // loop_header_branch
      %22 = sbr.rel (%p20) target = $region8
    $region5: #{tpu_custom_call.1} parent=1 // loop_body
      %s24 = ssub.s32 %s19, 1
      %s25 = ssub.s32 %s19, 2
      %s35 = sadd.s32 1, %s28
      %p36 = scmp.ge.s32.totalorder %s35, 1
      %s37 = scalar_select %p36, 0, %s35
      %s38 = sadd.s32 1, %s27
      %s39 = scalar_select %p36, %s38, %s27
      %p40 = scmp.ge.s32.totalorder %s39, 1
      %s41 = scalar_select %p40, 0, %s39
      %s42 = sadd.s32 1, %s26
      %s43 = scalar_select %p40, %s42, %s26
      %p44 = scmp.ge.s32.totalorder %s43, 2
      %s45 = scalar_select %p44, 0, %s43
      %s46 = ssub.s32 %s26, %s45
      %s47 = ssub.s32 %s28, %s37
      %s48 = sor.u32 %s46, %s47
      %p49 = scmp.eq.s32.totalorder %s48, 0
      %s51 = sadd.s32 %s50, 1
      %s52 = scalar_select %p49, %s50, %s51
      %p55 = pneg %p49
      %p56 = scmp.eq.s32.totalorder %s19, 1
      %p57 = por %p55, %p56
      %p58 = scmp.ne.s32.totalorder %s50, %s53
      %p59 = scmp.eq.s32.totalorder %s19, 0
      %p60 = por %p58, %p59
      %p61 = scmp.ne.s32.totalorder %s50, %s53
      %p62 = scmp.eq.s32.totalorder %s24, 1
      %p63 = por %p61, %p62
      %p64 = scmp.ne.s32.totalorder %s53, %s54
      %p65 = scmp.eq.s32.totalorder %s24, 0
      %p66 = por %p64, %p65
      %p67 = scmp.ne.s32.totalorder %s53, %s54
      %p68 = scmp.eq.s32.totalorder %s25, 1
      %p69 = por %p67, %p68
      %p71 = scmp.ne.s32.totalorder %s54, %s70
      %p72 = scmp.eq.s32.totalorder %s25, 0
      %p73 = por %p71, %p72
      %s74 = ssub.s32 %s28, %s37
      %s75 = ssub.s32 %s27, %s41
      %s76 = sor.u32 %s74, %s75
      %p77 = scmp.eq.s32.totalorder %s76, 0
      %s79 = sadd.s32 %s78, 1
      %s80 = scalar_select %p77, %s78, %s79
      %p83 = pneg %p77
      %p84 = scmp.eq.s32.totalorder %s19, 1
      %p85 = por %p83, %p84
      %p86 = scmp.ne.s32.totalorder %s78, %s81
      %p87 = scmp.eq.s32.totalorder %s19, 0
      %p88 = por %p86, %p87
      %p89 = scmp.ne.s32.totalorder %s78, %s81
      %p90 = scmp.eq.s32.totalorder %s24, 1
      %p91 = por %p89, %p90
      %p92 = scmp.ne.s32.totalorder %s81, %s82
      %p93 = scmp.eq.s32.totalorder %s24, 0
      %p94 = por %p92, %p93
      %p95 = scmp.ne.s32.totalorder %s81, %s82
      %p96 = scmp.eq.s32.totalorder %s25, 1
      %p97 = por %p95, %p96
      %p99 = scmp.ne.s32.totalorder %s82, %s98
      %p100 = scmp.eq.s32.totalorder %s25, 0
      %p101 = por %p99, %p100
      %s102 = ssub.s32 %s27, %s41
      %p103 = scmp.eq.s32.totalorder %s102, 0
      %s105 = sadd.s32 %s104, 1
      %s106 = scalar_select %p103, %s104, %s105
      %p109 = pneg %p103
      %p110 = scmp.eq.s32.totalorder %s19, 1
      %p111 = por %p109, %p110
      %p112 = scmp.ne.s32.totalorder %s104, %s107
      %p113 = scmp.eq.s32.totalorder %s19, 0
      %p114 = por %p112, %p113
      %p115 = scmp.ne.s32.totalorder %s104, %s107
      %p116 = scmp.eq.s32.totalorder %s24, 1
      %p117 = por %p115, %p116
      %p118 = scmp.ne.s32.totalorder %s107, %s108
      %p119 = scmp.eq.s32.totalorder %s24, 0
      %p120 = por %p118, %p119
      %p121 = scmp.ne.s32.totalorder %s107, %s108
      %p122 = scmp.eq.s32.totalorder %s25, 1
      %p123 = por %p121, %p122
      %p125 = scmp.ne.s32.totalorder %s108, %s124
      %p126 = scmp.eq.s32.totalorder %s25, 0
      %p127 = por %p125, %p126
      %s129 = sadd.s32 %s128, 1
      %p132 = scmp.eq.s32.totalorder %s19, 1
      %p133 = scmp.ne.s32.totalorder %s128, %s130
      %p134 = scmp.eq.s32.totalorder %s19, 0
      %p135 = por %p133, %p134
      %p136 = scmp.ne.s32.totalorder %s128, %s130
      %p137 = scmp.eq.s32.totalorder %s24, 1
      %p138 = por %p136, %p137
      %p139 = scmp.ne.s32.totalorder %s130, %s131
      %p140 = scmp.eq.s32.totalorder %s24, 0
      %p141 = por %p139, %p140
      %p142 = scmp.ne.s32.totalorder %s130, %s131
      %p143 = scmp.eq.s32.totalorder %s25, 1
      %p144 = por %p142, %p143
      %p146 = scmp.ne.s32.totalorder %s131, %s145
      %p147 = scmp.eq.s32.totalorder %s25, 0
      %p148 = por %p146, %p147
      %s150 = sadd.s32 %s149, 1
      %p153 = scmp.eq.s32.totalorder %s19, 1
      %p154 = scmp.ne.s32.totalorder %s149, %s151
      %p155 = scmp.eq.s32.totalorder %s19, 0
      %p156 = por %p154, %p155
      %p157 = scmp.ne.s32.totalorder %s149, %s151
      %p158 = scmp.eq.s32.totalorder %s24, 1
      %p159 = por %p157, %p158
      %p160 = scmp.ne.s32.totalorder %s151, %s152
      %p161 = scmp.eq.s32.totalorder %s24, 0
      %p162 = por %p160, %p161
      %p163 = scmp.ne.s32.totalorder %s151, %s152
      %p164 = scmp.eq.s32.totalorder %s25, 1
      %p165 = por %p163, %p164
      %p167 = scmp.ne.s32.totalorder %s152, %s166
      %p168 = scmp.eq.s32.totalorder %s25, 0
      %p169 = por %p167, %p168
      %s170 = ssub.s32 %s26, %s45
      %p171 = scmp.eq.s32.totalorder %s170, 0
      %s173 = sadd.s32 %s172, 1
      %s174 = scalar_select %p171, %s172, %s173
      %p177 = pneg %p171
      %p178 = scmp.eq.s32.totalorder %s19, 1
      %p179 = por %p177, %p178
      %p180 = scmp.ne.s32.totalorder %s172, %s175
      %p181 = scmp.eq.s32.totalorder %s19, 0
      %p182 = por %p180, %p181
      %p183 = scmp.ne.s32.totalorder %s172, %s175
      %p184 = scmp.eq.s32.totalorder %s24, 1
      %p185 = por %p183, %p184
      %p186 = scmp.ne.s32.totalorder %s175, %s176
      %p187 = scmp.eq.s32.totalorder %s24, 0
      %p188 = por %p186, %p187
      %p189 = scmp.ne.s32.totalorder %s175, %s176
      %p190 = scmp.eq.s32.totalorder %s25, 1
      %p191 = por %p189, %p190
      %p193 = scmp.ne.s32.totalorder %s176, %s192
      %p194 = scmp.eq.s32.totalorder %s25, 0
      %p195 = por %p193, %p194
      %s196 = ssub.s32 %s26, %s45
      %s197 = ssub.s32 %s27, %s41
      %s198 = sor.u32 %s196, %s197
      %p199 = scmp.eq.s32.totalorder %s198, 0
      %s201 = sadd.s32 %s200, 1
      %s202 = scalar_select %p199, %s200, %s201
      %p205 = pneg %p199
      %p206 = scmp.eq.s32.totalorder %s19, 1
      %p207 = por %p205, %p206
      %p208 = scmp.ne.s32.totalorder %s200, %s203
      %p209 = scmp.eq.s32.totalorder %s19, 0
      %p210 = por %p208, %p209
      %p211 = scmp.ne.s32.totalorder %s200, %s203
      %p212 = scmp.eq.s32.totalorder %s24, 1
      %p213 = por %p211, %p212
      %p214 = scmp.ne.s32.totalorder %s203, %s204
      %p215 = scmp.eq.s32.totalorder %s24, 0
      %p216 = por %p214, %p215
      %p217 = scmp.ne.s32.totalorder %s203, %s204
      %p218 = scmp.eq.s32.totalorder %s25, 1
      %p219 = por %p217, %p218
      %p221 = scmp.ne.s32.totalorder %s204, %s220
      %p222 = scmp.eq.s32.totalorder %s25, 0
      %p223 = por %p221, %p222
      %p224 = scmp.le.s32.totalorder 1, %s19
      %p225 = scmp.lt.s32.totalorder %s19, 3
      %p226 = pnand %p224, %p225
      %p227 = pneg %p226
      // Predicated region
      $region9: #{tpu_custom_call.1} parent=5 // pred_check
        _
      $region10: #{tpu_custom_call.1} parent=5 // pred_check_branch
        %229 = sbr.rel (%p226) target = $region12
      $region11: #{tpu_custom_call.1} parent=5 // pred_region
        %s230 = ssub.s32 %s19, 1
        // Predicated region
        $region13: #{tpu_custom_call.1} parent=11 // pred_check
          %p231 = pneg %p94
        $region14: #{tpu_custom_call.1} parent=11 // pred_check_branch
          %233 = sbr.rel (%p231) target = $region16
        $region15: #{tpu_custom_call.1} parent=11 // pred_region
          %s234 = smul.u32 32, %s31
          %s235 = smul.u32 2, %s30
          %s237 = ssub.s32 4096, 4096
          %238 = vsyncadd [#allocation7], %s237
          %s239 = smul.addr %s234, 2
          %s240 = sadd.s32 %s235, %s239
          %s241 = smul.addr %s240, 64
          %s242 = scalar_lea.hbm %s1, %s241
          %s243 = sshll.u32 [#allocation6], 4
          %s244 = int_to_ptr.vmem [resolvable:$true] %s243
          %249 = dma.hbm_to_vmem [thread:$0]  %s242, 4096, %s244, [#allocation7], 128, 128, 8
        $region16: #{tpu_custom_call.1} parent=11 // pred_fallthru
          _
        // Predicated region
        $region17: #{tpu_custom_call.1} parent=11 // pred_check
          %p250 = pneg %p120
        $region18: #{tpu_custom_call.1} parent=11 // pred_check_branch
          %252 = sbr.rel (%p250) target = $region20
        $region19: #{tpu_custom_call.1} parent=11 // pred_region
          %s253 = smul.u32 2, %s30
          %p254 = scmp.lt.s32.totalorder %s253, 1
          %s255 = scalar_select %p254, %s253, 1
          %s256 = scalar_lea.vmem %s2, %s255
          %s257 = smul.u32 2, %s30
        $region20: #{tpu_custom_call.1} parent=11 // pred_fallthru
          _
        // Predicated region
        $region21: #{tpu_custom_call.1} parent=11 // pred_check
          %p258 = pneg %p141
        $region22: #{tpu_custom_call.1} parent=11 // pred_check_branch
          %260 = sbr.rel (%p258) target = $region24
        $region23: #{tpu_custom_call.1} parent=11 // pred_region
          _
        $region24: #{tpu_custom_call.1} parent=11 // pred_fallthru
          _
        // Predicated region
        $region25: #{tpu_custom_call.1} parent=11 // pred_check
          %p261 = pneg %p162
        $region26: #{tpu_custom_call.1} parent=11 // pred_check_branch
          %263 = sbr.rel (%p261) target = $region28
        $region27: #{tpu_custom_call.1} parent=11 // pred_region
          _
        $region28: #{tpu_custom_call.1} parent=11 // pred_fallthru
          _
      $region12: #{tpu_custom_call.1} parent=5 // pred_fallthru
        _
      %p264 = scmp.lt.s32.totalorder %s19, 2
      // Predicated region
      $region29: #{tpu_custom_call.1} parent=5 // pred_check
        %p265 = pneg %p264
      $region30: #{tpu_custom_call.1} parent=5 // pred_check_branch
        %267 = sbr.rel (%p265) target = $region32
      $region31: #{tpu_custom_call.1} parent=5 // pred_region
        // Predicated region
        $region33: #{tpu_custom_call.1} parent=31 // pred_check
          %p268 = pneg %p60
        $region34: #{tpu_custom_call.1} parent=31 // pred_check_branch
          %270 = sbr.rel (%p268) target = $region36
        $region35: #{tpu_custom_call.1} parent=31 // pred_region
          %s271 = sand.u32 %s19, 1
          %s272 = scalar_lea.sflag [#allocation4], %s271
          %s273 = sand.u32 %s50, 1
          %s274 = smul.addr %s273, 64
          %s275 = scalar_lea.vmem [#allocation3], %s274
          %s276 = smul.u32 8, %s26
          %s277 = smul.u32 2, %s28
          %s279 = ssub.s32 1024, 1024
          %280 = vsyncadd %s272, %s279
          %s281 = smul.addr %s276, 2
          %s282 = sadd.s32 %s277, %s281
          %s283 = smul.addr %s282, 64
          %s284 = scalar_lea.hbm %s0, %s283
          %s285 = sshll.u32 %s275, 4
          %s286 = int_to_ptr.vmem [resolvable:$true] %s285
          %291 = dma.hbm_to_vmem [thread:$0]  %s284, 1024, %s286, %s272, 128, 128, 8
        $region36: #{tpu_custom_call.1} parent=31 // pred_fallthru
          _
        // Predicated region
        $region37: #{tpu_custom_call.1} parent=31 // pred_check
          %p292 = pneg %p182
        $region38: #{tpu_custom_call.1} parent=31 // pred_check_branch
          %294 = sbr.rel (%p292) target = $region40
        $region39: #{tpu_custom_call.1} parent=31 // pred_region
          %s295 = sand.u32 %s19, 1
          %s296 = scalar_lea.sflag [#allocation4], %s295
          %s297 = sand.u32 %s172, 1
          %s298 = smul.addr %s297, 128
          %s299 = scalar_lea.vmem [#allocation8], %s298
          %s300 = smul.u32 8, %s26
          %s302 = ssub.s32 2048, 2048
          %303 = vsyncadd %s296, %s302
          %s304 = smul.addr %s300, 2
          %s305 = smul.addr %s304, 128
          %s306 = scalar_lea.hbm %s5, %s305
          %s307 = sshll.u32 %s299, 4
          %s308 = int_to_ptr.vmem [resolvable:$true] %s307
          %313 = dma.hbm_to_vmem [thread:$0]  %s306, 2048, %s308, %s296, 256, 256, 16
        $region40: #{tpu_custom_call.1} parent=31 // pred_fallthru
          _
      $region32: #{tpu_custom_call.1} parent=5 // pred_fallthru
        _
      %p314 = scmp.le.s32.totalorder 1, %s19
      %p315 = scmp.lt.s32.totalorder %s19, 3
      %p316 = pnand %p314, %p315
      %p317 = pneg %p316
      // Predicated region
      $region41: #{tpu_custom_call.1} parent=5 // pred_check
        _
      $region42: #{tpu_custom_call.1} parent=5 // pred_check_branch
        %319 = sbr.rel (%p316) target = $region44
      $region43: #{tpu_custom_call.1} parent=5 // pred_region
        %s320 = ssub.s32 %s19, 1
        %s321 = sand.u32 %s24, 1
        %s322 = scalar_lea.sflag [#allocation4], %s321
        %s323 = sand.u32 %s53, 1
        %s324 = smul.addr %s323, 64
        %s325 = scalar_lea.vmem [#allocation3], %s324
        // Predicated region
        $region45: #{tpu_custom_call.1} parent=43 // pred_check
          %p326 = pneg %p66
        $region46: #{tpu_custom_call.1} parent=43 // pred_check_branch
          %328 = sbr.rel (%p326) target = $region48
        $region47: #{tpu_custom_call.1} parent=43 // pred_region
          %329 = dma.done %s322, 1024
        $region48: #{tpu_custom_call.1} parent=43 // pred_fallthru
          _
        // Predicated region
        $region49: #{tpu_custom_call.1} parent=43 // pred_check
          %p330 = pneg %p94
        $region50: #{tpu_custom_call.1} parent=43 // pred_check_branch
          %332 = sbr.rel (%p330) target = $region52
        $region51: #{tpu_custom_call.1} parent=43 // pred_region
          %333 = dma.done [#allocation7], 4096
        $region52: #{tpu_custom_call.1} parent=43 // pred_fallthru
          _
        %s334 = sand.u32 %s24, 1
        %s335 = scalar_lea.sflag [#allocation4], %s334
        %s336 = sand.u32 %s175, 1
        %s337 = smul.addr %s336, 128
        %s338 = scalar_lea.vmem [#allocation8], %s337
        // Predicated region
        $region53: #{tpu_custom_call.1} parent=43 // pred_check
          %p339 = pneg %p188
        $region54: #{tpu_custom_call.1} parent=43 // pred_check_branch
          %341 = sbr.rel (%p339) target = $region56
        $region55: #{tpu_custom_call.1} parent=43 // pred_region
          %342 = dma.done %s335, 2048
        $region56: #{tpu_custom_call.1} parent=43 // pred_fallthru
          _
        %s343 = sand.u32 %s24, 1
        %s344 = scalar_lea.sflag [#allocation4], %s343
        %s345 = sand.u32 %s53, 1
        %s346 = smul.addr %s345, 64
        %s347 = scalar_lea.vmem [#allocation3], %s346
        %p348 = pneg %p66
        %p349 = pneg %p63
        %p350 = pneg %p94
        %p351 = pneg %p91
        %s352 = smul.u32 2, %s30
        %p353 = scmp.lt.s32.totalorder %s352, 1
        %s354 = scalar_select %p353, %s352, 1
        %s355 = scalar_lea.vmem %s2, %s354
        %p356 = pneg %p120
        %p357 = pneg %p117
        %p358 = pneg %p141
        %p359 = pneg %p138
        %p360 = pneg %p162
        %p361 = pneg %p159
        %s362 = sand.u32 %s24, 1
        %s363 = scalar_lea.sflag [#allocation4], %s362
        %s364 = sand.u32 %s175, 1
        %s365 = smul.addr %s364, 128
        %s366 = scalar_lea.vmem [#allocation8], %s365
        %p367 = pneg %p188
        %p368 = pneg %p185
        %p369 = pneg %p216
        %p370 = pneg %p213
        %s371 = sand.u32 %s203, 1
        %s372 = scalar_lea.sflag [#allocation5], %s371
        %s373 = sand.u32 %s203, 1
        %s374 = smul.addr %s373, 64
        %s375 = scalar_lea.vmem [#allocation9], %s374
        %s376 = smul.u32 8, %s29
        %s377 = smul.u32 2, %s31
        %s378 = smul.u32 32, %s31
        %s379 = smul.u32 2, %s30
        %s380 = smul.u32 2, %s30
        %p381 = scmp.lt.s32.totalorder %s380, 1
        %s382 = scalar_select %p381, %s380, 1
        %s383 = scalar_lea.vmem %s2, %s382
        %s384 = smul.u32 2, %s30
        %s385 = smul.u32 8, %s29
        %s386 = smul.u32 8, %s29
        %s387 = smul.u32 2, %s30
        %p388 = scmp.eq.s32.totalorder %s31, 0
        // Predicated region
        $region57: #{tpu_custom_call.1} parent=43 // pred_check
          %p389 = pneg %p388
        $region58: #{tpu_custom_call.1} parent=43 // pred_check_branch
          %391 = sbr.rel (%p389) target = $region60
        $region59: #{tpu_custom_call.1} parent=43 // pred_region
          %392 = vst [vmem:[#allocation2] sm:$0xff] 0.0
          %393 = vst [vmem:[#allocation2 + $0x8] sm:$0xff] 0.0
          %394 = vst [vmem:[#allocation2 + $0x10] sm:$0xff] 0.0
          %395 = vst [vmem:[#allocation2 + $0x18] sm:$0xff] 0.0
          %396 = vst [vmem:[#allocation2 + $0x20] sm:$0xff] 0.0
          %397 = vst [vmem:[#allocation2 + $0x28] sm:$0xff] 0.0
          %398 = vst [vmem:[#allocation2 + $0x30] sm:$0xff] 0.0
          %399 = vst [vmem:[#allocation2 + $0x38] sm:$0xff] 0.0
          %400 = vst [vmem:[#allocation2 + $0x40] sm:$0xff] 0.0
          %401 = vst [vmem:[#allocation2 + $0x48] sm:$0xff] 0.0
          %402 = vst [vmem:[#allocation2 + $0x50] sm:$0xff] 0.0
          %403 = vst [vmem:[#allocation2 + $0x58] sm:$0xff] 0.0
          %404 = vst [vmem:[#allocation2 + $0x60] sm:$0xff] 0.0
          %405 = vst [vmem:[#allocation2 + $0x68] sm:$0xff] 0.0
          %406 = vst [vmem:[#allocation2 + $0x70] sm:$0xff] 0.0
          %407 = vst [vmem:[#allocation2 + $0x78] sm:$0xff] 0.0
        $region60: #{tpu_custom_call.1} parent=43 // pred_fallthru
          _
        %v408 = vld [vmem:[#allocation2] sm:$0xff]
        %v409 = vld [vmem:[#allocation2 + $0x8] sm:$0xff]
        %v410 = vld [vmem:[#allocation2 + $0x10] sm:$0xff]
        %v411 = vld [vmem:[#allocation2 + $0x18] sm:$0xff]
        %v412 = vld [vmem:[#allocation2 + $0x20] sm:$0xff]
        %v413 = vld [vmem:[#allocation2 + $0x28] sm:$0xff]
        %v414 = vld [vmem:[#allocation2 + $0x30] sm:$0xff]
        %v415 = vld [vmem:[#allocation2 + $0x38] sm:$0xff]
        %v416 = vld [vmem:[#allocation2 + $0x40] sm:$0xff]
        %v417 = vld [vmem:[#allocation2 + $0x48] sm:$0xff]
        %v418 = vld [vmem:[#allocation2 + $0x50] sm:$0xff]
        %v419 = vld [vmem:[#allocation2 + $0x58] sm:$0xff]
        %v420 = vld [vmem:[#allocation2 + $0x60] sm:$0xff]
        %v421 = vld [vmem:[#allocation2 + $0x68] sm:$0xff]
        %v422 = vld [vmem:[#allocation2 + $0x70] sm:$0xff]
        %v423 = vld [vmem:[#allocation2 + $0x78] sm:$0xff]
        %v424 = vld [vmem:[%s325] sm:$0xff]
        %v425 = vld [vmem:[%s325 + $0x8] sm:$0xff]
        %v426 = vld [vmem:[%s325 + $0x10] sm:$0xff]
        %v427 = vld [vmem:[%s325 + $0x18] sm:$0xff]
        %v428 = vld [vmem:[%s325 + $0x20] sm:$0xff]
        %v429 = vld [vmem:[%s325 + $0x28] sm:$0xff]
        %v430 = vld [vmem:[%s325 + $0x30] sm:$0xff]
        %v431 = vld [vmem:[%s325 + $0x38] sm:$0xff]
        %v432 = vld [vmem:[#allocation6] sm:$0xff]
        %v433 = vld [vmem:[#allocation6 + $0x8] sm:$0xff]
        %v434 = vld [vmem:[#allocation6 + $0x10] sm:$0xff]
        %v435 = vld [vmem:[#allocation6 + $0x18] sm:$0xff]
        %v436 = vld [vmem:[#allocation6 + $0x20] sm:$0xff]
        %v437 = vld [vmem:[#allocation6 + $0x28] sm:$0xff]
        %v438 = vld [vmem:[#allocation6 + $0x30] sm:$0xff]
        %v439 = vld [vmem:[#allocation6 + $0x38] sm:$0xff]
        %v440 = vld [vmem:[#allocation6 + $0x40] sm:$0xff]
        %v441 = vld [vmem:[#allocation6 + $0x48] sm:$0xff]
        %v442 = vld [vmem:[#allocation6 + $0x50] sm:$0xff]
        %v443 = vld [vmem:[#allocation6 + $0x58] sm:$0xff]
        %v444 = vld [vmem:[#allocation6 + $0x60] sm:$0xff]
        %v445 = vld [vmem:[#allocation6 + $0x68] sm:$0xff]
        %v446 = vld [vmem:[#allocation6 + $0x70] sm:$0xff]
        %v447 = vld [vmem:[#allocation6 + $0x78] sm:$0xff]
        %v448 = vld [vmem:[#allocation6 + $0x80] sm:$0xff]
        %v449 = vld [vmem:[#allocation6 + $0x88] sm:$0xff]
        %v450 = vld [vmem:[#allocation6 + $0x90] sm:$0xff]
        %v451 = vld [vmem:[#allocation6 + $0x98] sm:$0xff]
        %v452 = vld [vmem:[#allocation6 + $0xa0] sm:$0xff]
        %v453 = vld [vmem:[#allocation6 + $0xa8] sm:$0xff]
        %v454 = vld [vmem:[#allocation6 + $0xb0] sm:$0xff]
        %v455 = vld [vmem:[#allocation6 + $0xb8] sm:$0xff]
        %v456 = vld [vmem:[#allocation6 + $0xc0] sm:$0xff]
        %v457 = vld [vmem:[#allocation6 + $0xc8] sm:$0xff]
        %v458 = vld [vmem:[#allocation6 + $0xd0] sm:$0xff]
        %v459 = vld [vmem:[#allocation6 + $0xd8] sm:$0xff]
        %v460 = vld [vmem:[#allocation6 + $0xe0] sm:$0xff]
        %v461 = vld [vmem:[#allocation6 + $0xe8] sm:$0xff]
        %v462 = vld [vmem:[#allocation6 + $0xf0] sm:$0xff]
        %v463 = vld [vmem:[#allocation6 + $0xf8] sm:$0xff]
        %v472 = vunpack.c.l.b16 %v424
        %v473 = vunpack.c.h.b16 %v424
        %v474 = vunpack.c.l.b16 %v425
        %v475 = vunpack.c.h.b16 %v425
        %v476 = vunpack.c.l.b16 %v426
        %v477 = vunpack.c.h.b16 %v426
        %v478 = vunpack.c.l.b16 %v427
        %v479 = vunpack.c.h.b16 %v427
        %v480 = vunpack.c.l.b16 %v428
        %v481 = vunpack.c.h.b16 %v428
        %v482 = vunpack.c.l.b16 %v429
        %v483 = vunpack.c.h.b16 %v429
        %v484 = vunpack.c.l.b16 %v430
        %v485 = vunpack.c.h.b16 %v430
        %v486 = vunpack.c.l.b16 %v431
        %v487 = vunpack.c.h.b16 %v431
        %v488 = vpack.c.b16 %v474, %v472
        %v489 = vpack.c.b16 %v475, %v473
        %v490 = vpack.c.b16 %v478, %v476
        %v491 = vpack.c.b16 %v479, %v477
        %v492 = vpack.c.b16 %v482, %v480
        %v493 = vpack.c.b16 %v483, %v481
        %v494 = vpack.c.b16 %v486, %v484
        %v495 = vpack.c.b16 %v487, %v485
        %v536 = vunpack.c.l.b16 %v432
        %v537 = vunpack.c.h.b16 %v432
        %v538 = vunpack.c.l.b16 %v433
        %v539 = vunpack.c.h.b16 %v433
        %v540 = vunpack.c.l.b16 %v434
        %v541 = vunpack.c.h.b16 %v434
        %v542 = vunpack.c.l.b16 %v435
        %v543 = vunpack.c.h.b16 %v435
        %v544 = vunpack.c.l.b16 %v436
        %v545 = vunpack.c.h.b16 %v436
        %v546 = vunpack.c.l.b16 %v437
        %v547 = vunpack.c.h.b16 %v437
        %v548 = vunpack.c.l.b16 %v438
        %v549 = vunpack.c.h.b16 %v438
        %v550 = vunpack.c.l.b16 %v439
        %v551 = vunpack.c.h.b16 %v439
        %v552 = vunpack.c.l.b16 %v440
        %v553 = vunpack.c.h.b16 %v440
        %v554 = vunpack.c.l.b16 %v441
        %v555 = vunpack.c.h.b16 %v441
        %v556 = vunpack.c.l.b16 %v442
        %v557 = vunpack.c.h.b16 %v442
        %v558 = vunpack.c.l.b16 %v443
        %v559 = vunpack.c.h.b16 %v443
        %v560 = vunpack.c.l.b16 %v444
        %v561 = vunpack.c.h.b16 %v444
        %v562 = vunpack.c.l.b16 %v445
        %v563 = vunpack.c.h.b16 %v445
        %v564 = vunpack.c.l.b16 %v446
        %v565 = vunpack.c.h.b16 %v446
        %v566 = vunpack.c.l.b16 %v447
        %v567 = vunpack.c.h.b16 %v447
        %v568 = vunpack.c.l.b16 %v448
        %v569 = vunpack.c.h.b16 %v448
        %v570 = vunpack.c.l.b16 %v449
        %v571 = vunpack.c.h.b16 %v449
        %v572 = vunpack.c.l.b16 %v450
        %v573 = vunpack.c.h.b16 %v450
        %v574 = vunpack.c.l.b16 %v451
        %v575 = vunpack.c.h.b16 %v451
        %v576 = vunpack.c.l.b16 %v452
        %v577 = vunpack.c.h.b16 %v452
        %v578 = vunpack.c.l.b16 %v453
        %v579 = vunpack.c.h.b16 %v453
        %v580 = vunpack.c.l.b16 %v454
        %v581 = vunpack.c.h.b16 %v454
        %v582 = vunpack.c.l.b16 %v455
        %v583 = vunpack.c.h.b16 %v455
        %v584 = vunpack.c.l.b16 %v456
        %v585 = vunpack.c.h.b16 %v456
        %v586 = vunpack.c.l.b16 %v457
        %v587 = vunpack.c.h.b16 %v457
        %v588 = vunpack.c.l.b16 %v458
        %v589 = vunpack.c.h.b16 %v458
        %v590 = vunpack.c.l.b16 %v459
        %v591 = vunpack.c.h.b16 %v459
        %v592 = vunpack.c.l.b16 %v460
        %v593 = vunpack.c.h.b16 %v460
        %v594 = vunpack.c.l.b16 %v461
        %v595 = vunpack.c.h.b16 %v461
        %v596 = vunpack.c.l.b16 %v462
        %v597 = vunpack.c.h.b16 %v462
        %v598 = vunpack.c.l.b16 %v463
        %v599 = vunpack.c.h.b16 %v463
        %v600 = vpack.c.b16 %v538, %v536
        %v601 = vpack.c.b16 %v539, %v537
        %v602 = vpack.c.b16 %v542, %v540
        %v603 = vpack.c.b16 %v543, %v541
        %v604 = vpack.c.b16 %v546, %v544
        %v605 = vpack.c.b16 %v547, %v545
        %v606 = vpack.c.b16 %v550, %v548
        %v607 = vpack.c.b16 %v551, %v549
        %v608 = vpack.c.b16 %v554, %v552
        %v609 = vpack.c.b16 %v555, %v553
        %v610 = vpack.c.b16 %v558, %v556
        %v611 = vpack.c.b16 %v559, %v557
        %v612 = vpack.c.b16 %v562, %v560
        %v613 = vpack.c.b16 %v563, %v561
        %v614 = vpack.c.b16 %v566, %v564
        %v615 = vpack.c.b16 %v567, %v565
        %v616 = vpack.c.b16 %v570, %v568
        %v617 = vpack.c.b16 %v571, %v569
        %v618 = vpack.c.b16 %v574, %v572
        %v619 = vpack.c.b16 %v575, %v573
        %v620 = vpack.c.b16 %v578, %v576
        %v621 = vpack.c.b16 %v579, %v577
        %v622 = vpack.c.b16 %v582, %v580
        %v623 = vpack.c.b16 %v583, %v581
        %v624 = vpack.c.b16 %v586, %v584
        %v625 = vpack.c.b16 %v587, %v585
        %v626 = vpack.c.b16 %v590, %v588
        %v627 = vpack.c.b16 %v591, %v589
        %v628 = vpack.c.b16 %v594, %v592
        %v629 = vpack.c.b16 %v595, %v593
        %v630 = vpack.c.b16 %v598, %v596
        %v631 = vpack.c.b16 %v599, %v597
        %664 = vmatprep.subr.bf16.mxu0 %v601
        %665 = vmatpush1.bf16.msra.mxu0 %v600
        %666 = vmatprep.subr.bf16.mxu0 %v603
        %667 = vmatpush1.bf16.msra.mxu0 %v602
        %668 = vmatprep.subr.bf16.mxu0 %v605
        %669 = vmatpush1.bf16.msra.mxu0 %v604
        %670 = vmatprep.subr.bf16.mxu0 %v607
        %671 = vmatpush1.bf16.msra.mxu0 %v606
        %672 = vmatprep.subr.bf16.mxu0 %v609
        %673 = vmatpush1.bf16.msra.mxu0 %v608
        %674 = vmatprep.subr.bf16.mxu0 %v611
        %675 = vmatpush1.bf16.msra.mxu0 %v610
        %676 = vmatprep.subr.bf16.mxu0 %v613
        %677 = vmatpush1.bf16.msra.mxu0 %v612
        %678 = vmatprep.subr.bf16.mxu0 %v615
        %679 = vmatpush1.bf16.msra.mxu0 %v614
        %680 = vmatprep.subr.bf16.mxu0 %v617
        %681 = vmatpush1.bf16.msra.mxu0 %v616
        %682 = vmatprep.subr.bf16.mxu0 %v619
        %683 = vmatpush1.bf16.msra.mxu0 %v618
        %684 = vmatprep.subr.bf16.mxu0 %v621
        %685 = vmatpush1.bf16.msra.mxu0 %v620
        %686 = vmatprep.subr.bf16.mxu0 %v623
        %687 = vmatpush1.bf16.msra.mxu0 %v622
        %688 = vmatprep.subr.bf16.mxu0 %v625
        %689 = vmatpush1.bf16.msra.mxu0 %v624
        %690 = vmatprep.subr.bf16.mxu0 %v627
        %691 = vmatpush1.bf16.msra.mxu0 %v626
        %692 = vmatprep.subr.bf16.mxu0 %v629
        %693 = vmatpush1.bf16.msra.mxu0 %v628
        %694 = vmatprep.subr.bf16.mxu0 %v631
        %695 = vmatpush1.bf16.msra.mxu0 %v630
        %696 = vmatprep.mubr.bf16.mxu0 %v489
        %697 = vmatmul.mubr.bf16.gmra.mrb[0].mxu0 %v488
        %v698 = vpop.f32.mrb[0].mxu0
        %v699 = vadd.f32 0.0, %v698
        %v700 = vpop.f32.mrb[0].mxu0
        %v701 = vadd.f32 0.0, %v700
        %v702 = vpop.f32.mrb[0].mxu0
        %v703 = vadd.f32 0.0, %v702
        %v704 = vpop.f32.mrb[0].mxu0
        %v705 = vadd.f32 0.0, %v704
        %706 = vmatprep.mubr.bf16.mxu0 %v491
        %707 = vmatmul.mubr.bf16.gmra.mrb[0].mxu0 %v490
        %v708 = vpop.f32.mrb[0].mxu0
        %v709 = vadd.f32 0.0, %v708
        %v710 = vpop.f32.mrb[0].mxu0
        %v711 = vadd.f32 0.0, %v710
        %v712 = vpop.f32.mrb[0].mxu0
        %v713 = vadd.f32 0.0, %v712
        %v714 = vpop.f32.mrb[0].mxu0
        %v715 = vadd.f32 0.0, %v714
        %716 = vmatprep.mubr.bf16.mxu0 %v493
        %717 = vmatmul.mubr.bf16.gmra.mrb[0].mxu0 %v492
        %v718 = vpop.f32.mrb[0].mxu0
        %v719 = vadd.f32 0.0, %v718
        %v720 = vpop.f32.mrb[0].mxu0
        %v721 = vadd.f32 0.0, %v720
        %v722 = vpop.f32.mrb[0].mxu0
        %v723 = vadd.f32 0.0, %v722
        %v724 = vpop.f32.mrb[0].mxu0
        %v725 = vadd.f32 0.0, %v724
        %726 = vmatprep.mubr.bf16.mxu0 %v495
        %727 = vmatmul.mubr.bf16.gmra.mrb[0].mxu0 %v494
        %v728 = vpop.f32.mrb[0].mxu0
        %v729 = vadd.f32 0.0, %v728
        %v730 = vpop.f32.mrb[0].mxu0
        %v731 = vadd.f32 0.0, %v730
        %v732 = vpop.f32.mrb[0].mxu0
        %v733 = vadd.f32 0.0, %v732
        %v734 = vpop.f32.mrb[0].mxu0
        %v735 = vadd.f32 0.0, %v734
        %736 = vdwg.mxu0
        %v737 = vadd.f32 %v408, %v699
        %v738 = vadd.f32 %v409, %v701
        %v739 = vadd.f32 %v410, %v703
        %v740 = vadd.f32 %v411, %v705
        %v741 = vadd.f32 %v412, %v709
        %v742 = vadd.f32 %v413, %v711
        %v743 = vadd.f32 %v414, %v713
        %v744 = vadd.f32 %v415, %v715
        %v745 = vadd.f32 %v416, %v719
        %v746 = vadd.f32 %v417, %v721
        %v747 = vadd.f32 %v418, %v723
        %v748 = vadd.f32 %v419, %v725
        %v749 = vadd.f32 %v420, %v729
        %v750 = vadd.f32 %v421, %v731
        %v751 = vadd.f32 %v422, %v733
        %v752 = vadd.f32 %v423, %v735
        %753 = vst [vmem:[#allocation2] sm:$0xff] %v737
        %754 = vst [vmem:[#allocation2 + $0x8] sm:$0xff] %v738
        %755 = vst [vmem:[#allocation2 + $0x10] sm:$0xff] %v739
        %756 = vst [vmem:[#allocation2 + $0x18] sm:$0xff] %v740
        %757 = vst [vmem:[#allocation2 + $0x20] sm:$0xff] %v741
        %758 = vst [vmem:[#allocation2 + $0x28] sm:$0xff] %v742
        %759 = vst [vmem:[#allocation2 + $0x30] sm:$0xff] %v743
        %760 = vst [vmem:[#allocation2 + $0x38] sm:$0xff] %v744
        %761 = vst [vmem:[#allocation2 + $0x40] sm:$0xff] %v745
        %762 = vst [vmem:[#allocation2 + $0x48] sm:$0xff] %v746
        %763 = vst [vmem:[#allocation2 + $0x50] sm:$0xff] %v747
        %764 = vst [vmem:[#allocation2 + $0x58] sm:$0xff] %v748
        %765 = vst [vmem:[#allocation2 + $0x60] sm:$0xff] %v749
        %766 = vst [vmem:[#allocation2 + $0x68] sm:$0xff] %v750
        %767 = vst [vmem:[#allocation2 + $0x70] sm:$0xff] %v751
        %768 = vst [vmem:[#allocation2 + $0x78] sm:$0xff] %v752
        // Predicated region
        $region61: #{tpu_custom_call.1} parent=43 // pred_check
          %p769 = pneg %p388
        $region62: #{tpu_custom_call.1} parent=43 // pred_check_branch
          %771 = sbr.rel (%p769) target = $region64
        $region63: #{tpu_custom_call.1} parent=43 // pred_region
          %v772 = vld [vmem:[#allocation2] sm:$0xff]
          %v773 = vld [vmem:[#allocation2 + $0x8] sm:$0xff]
          %v774 = vld [vmem:[#allocation2 + $0x10] sm:$0xff]
          %v775 = vld [vmem:[#allocation2 + $0x18] sm:$0xff]
          %v776 = vld [vmem:[#allocation2 + $0x20] sm:$0xff]
          %v777 = vld [vmem:[#allocation2 + $0x28] sm:$0xff]
          %v778 = vld [vmem:[#allocation2 + $0x30] sm:$0xff]
          %v779 = vld [vmem:[#allocation2 + $0x38] sm:$0xff]
          %v780 = vld [vmem:[#allocation2 + $0x40] sm:$0xff]
          %v781 = vld [vmem:[#allocation2 + $0x48] sm:$0xff]
          %v782 = vld [vmem:[#allocation2 + $0x50] sm:$0xff]
          %v783 = vld [vmem:[#allocation2 + $0x58] sm:$0xff]
          %v784 = vld [vmem:[#allocation2 + $0x60] sm:$0xff]
          %v785 = vld [vmem:[#allocation2 + $0x68] sm:$0xff]
          %v786 = vld [vmem:[#allocation2 + $0x70] sm:$0xff]
          %v787 = vld [vmem:[#allocation2 + $0x78] sm:$0xff]
          %v788 = vld [vmem:[%s383] sm:$0x3]
          %v790 = vlaneseq
          %v791 = vshrl.u32 %v790, 7
          %v792 = vsub.s32 0, %v791
          %v793 = vrot.slane %v788, %v792
          %v794 = vlaneseq
          %v795 = vshrl.u32 %v794, 7
          %v796 = vsub.s32 1, %v795
          %v797 = vrot.slane %v788, %v796
          %v800 = vadd.f32 %v772, %v793
          %v801 = vadd.f32 %v773, %v797
          %v802 = vadd.f32 %v774, %v793
          %v803 = vadd.f32 %v775, %v797
          %v804 = vadd.f32 %v776, %v793
          %v805 = vadd.f32 %v777, %v797
          %v806 = vadd.f32 %v778, %v793
          %v807 = vadd.f32 %v779, %v797
          %v808 = vadd.f32 %v780, %v793
          %v809 = vadd.f32 %v781, %v797
          %v810 = vadd.f32 %v782, %v793
          %v811 = vadd.f32 %v783, %v797
          %v812 = vadd.f32 %v784, %v793
          %v813 = vadd.f32 %v785, %v797
          %v814 = vadd.f32 %v786, %v793
          %v815 = vadd.f32 %v787, %v797
          %v816 = vmul.f32 %v800, %v800
          %v817 = vmul.f32 %v801, %v801
          %v818 = vmul.f32 %v802, %v802
          %v819 = vmul.f32 %v803, %v803
          %v820 = vmul.f32 %v804, %v804
          %v821 = vmul.f32 %v805, %v805
          %v822 = vmul.f32 %v806, %v806
          %v823 = vmul.f32 %v807, %v807
          %v824 = vmul.f32 %v808, %v808
          %v825 = vmul.f32 %v809, %v809
          %v826 = vmul.f32 %v810, %v810
          %v827 = vmul.f32 %v811, %v811
          %v828 = vmul.f32 %v812, %v812
          %v829 = vmul.f32 %v813, %v813
          %v830 = vmul.f32 %v814, %v814
          %v831 = vmul.f32 %v815, %v815
          %v832 = vmul.f32 %v800, %v816
          %v833 = vmul.f32 %v801, %v817
          %v834 = vmul.f32 %v802, %v818
          %v835 = vmul.f32 %v803, %v819
          %v836 = vmul.f32 %v804, %v820
          %v837 = vmul.f32 %v805, %v821
          %v838 = vmul.f32 %v806, %v822
          %v839 = vmul.f32 %v807, %v823
          %v840 = vmul.f32 %v808, %v824
          %v841 = vmul.f32 %v809, %v825
          %v842 = vmul.f32 %v810, %v826
          %v843 = vmul.f32 %v811, %v827
          %v844 = vmul.f32 %v812, %v828
          %v845 = vmul.f32 %v813, %v829
          %v846 = vmul.f32 %v814, %v830
          %v847 = vmul.f32 %v815, %v831
          %v848 = vmul.f32 %v832, 0.044715
          %v849 = vmul.f32 %v833, 0.044715
          %v850 = vmul.f32 %v834, 0.044715
          %v851 = vmul.f32 %v835, 0.044715
          %v852 = vmul.f32 %v836, 0.044715
          %v853 = vmul.f32 %v837, 0.044715
          %v854 = vmul.f32 %v838, 0.044715
          %v855 = vmul.f32 %v839, 0.044715
          %v856 = vmul.f32 %v840, 0.044715
          %v857 = vmul.f32 %v841, 0.044715
          %v858 = vmul.f32 %v842, 0.044715
          %v859 = vmul.f32 %v843, 0.044715
          %v860 = vmul.f32 %v844, 0.044715
          %v861 = vmul.f32 %v845, 0.044715
          %v862 = vmul.f32 %v846, 0.044715
          %v863 = vmul.f32 %v847, 0.044715
          %v864 = vadd.f32 %v800, %v848
          %v865 = vadd.f32 %v801, %v849
          %v866 = vadd.f32 %v802, %v850
          %v867 = vadd.f32 %v803, %v851
          %v868 = vadd.f32 %v804, %v852
          %v869 = vadd.f32 %v805, %v853
          %v870 = vadd.f32 %v806, %v854
          %v871 = vadd.f32 %v807, %v855
          %v872 = vadd.f32 %v808, %v856
          %v873 = vadd.f32 %v809, %v857
          %v874 = vadd.f32 %v810, %v858
          %v875 = vadd.f32 %v811, %v859
          %v876 = vadd.f32 %v812, %v860
          %v877 = vadd.f32 %v813, %v861
          %v878 = vadd.f32 %v814, %v862
          %v879 = vadd.f32 %v815, %v863
          %v880 = vmul.f32 %v864, 0.7978846
          %v881 = vmul.f32 %v865, 0.7978846
          %v882 = vmul.f32 %v866, 0.7978846
          %v883 = vmul.f32 %v867, 0.7978846
          %v884 = vmul.f32 %v868, 0.7978846
          %v885 = vmul.f32 %v869, 0.7978846
          %v886 = vmul.f32 %v870, 0.7978846
          %v887 = vmul.f32 %v871, 0.7978846
          %v888 = vmul.f32 %v872, 0.7978846
          %v889 = vmul.f32 %v873, 0.7978846
          %v890 = vmul.f32 %v874, 0.7978846
          %v891 = vmul.f32 %v875, 0.7978846
          %v892 = vmul.f32 %v876, 0.7978846
          %v893 = vmul.f32 %v877, 0.7978846
          %v894 = vmul.f32 %v878, 0.7978846
          %v895 = vmul.f32 %v879, 0.7978846
          %v896 = vtanh.pop %v880
          %v897 = vtanh.pop %v881
          %v898 = vtanh.pop %v882
          %v899 = vtanh.pop %v883
          %v900 = vtanh.pop %v884
          %v901 = vtanh.pop %v885
          %v902 = vtanh.pop %v886
          %v903 = vtanh.pop %v887
          %v904 = vtanh.pop %v888
          %v905 = vtanh.pop %v889
          %v906 = vtanh.pop %v890
          %v907 = vtanh.pop %v891
          %v908 = vtanh.pop %v892
          %v909 = vtanh.pop %v893
          %v910 = vtanh.pop %v894
          %v911 = vtanh.pop %v895
          %v912 = vadd.f32 %v896, 1.0
          %v913 = vadd.f32 %v897, 1.0
          %v914 = vadd.f32 %v898, 1.0
          %v915 = vadd.f32 %v899, 1.0
          %v916 = vadd.f32 %v900, 1.0
          %v917 = vadd.f32 %v901, 1.0
          %v918 = vadd.f32 %v902, 1.0
          %v919 = vadd.f32 %v903, 1.0
          %v920 = vadd.f32 %v904, 1.0
          %v921 = vadd.f32 %v905, 1.0
          %v922 = vadd.f32 %v906, 1.0
          %v923 = vadd.f32 %v907, 1.0
          %v924 = vadd.f32 %v908, 1.0
          %v925 = vadd.f32 %v909, 1.0
          %v926 = vadd.f32 %v910, 1.0
          %v927 = vadd.f32 %v911, 1.0
          %v928 = vmul.f32 %v912, 0.5
          %v929 = vmul.f32 %v913, 0.5
          %v930 = vmul.f32 %v914, 0.5
          %v931 = vmul.f32 %v915, 0.5
          %v932 = vmul.f32 %v916, 0.5
          %v933 = vmul.f32 %v917, 0.5
          %v934 = vmul.f32 %v918, 0.5
          %v935 = vmul.f32 %v919, 0.5
          %v936 = vmul.f32 %v920, 0.5
          %v937 = vmul.f32 %v921, 0.5
          %v938 = vmul.f32 %v922, 0.5
          %v939 = vmul.f32 %v923, 0.5
          %v940 = vmul.f32 %v924, 0.5
          %v941 = vmul.f32 %v925, 0.5
          %v942 = vmul.f32 %v926, 0.5
          %v943 = vmul.f32 %v927, 0.5
          %v944 = vmul.f32 %v800, %v928
          %v945 = vmul.f32 %v801, %v929
          %v946 = vmul.f32 %v802, %v930
          %v947 = vmul.f32 %v803, %v931
          %v948 = vmul.f32 %v804, %v932
          %v949 = vmul.f32 %v805, %v933
          %v950 = vmul.f32 %v806, %v934
          %v951 = vmul.f32 %v807, %v935
          %v952 = vmul.f32 %v808, %v936
          %v953 = vmul.f32 %v809, %v937
          %v954 = vmul.f32 %v810, %v938
          %v955 = vmul.f32 %v811, %v939
          %v956 = vmul.f32 %v812, %v940
          %v957 = vmul.f32 %v813, %v941
          %v958 = vmul.f32 %v814, %v942
          %v959 = vmul.f32 %v815, %v943
          %v960 = vadd.f32 %v944, %v945
          %961 = vadd.xlane.f32.xlu0 %v960
          %v962 = vpop.xlane.xlu0 %961
          %v963 = vadd.f32 %v946, %v947
          %964 = vadd.xlane.f32.xlu0 %v963
          %v965 = vpop.xlane.xlu0 %964
          %v966 = vadd.f32 %v948, %v949
          %967 = vadd.xlane.f32.xlu0 %v966
          %v968 = vpop.xlane.xlu0 %967
          %v969 = vadd.f32 %v950, %v951
          %970 = vadd.xlane.f32.xlu0 %v969
          %v971 = vpop.xlane.xlu0 %970
          %v972 = vadd.f32 %v952, %v953
          %973 = vadd.xlane.f32.xlu0 %v972
          %v974 = vpop.xlane.xlu0 %973
          %v975 = vadd.f32 %v954, %v955
          %976 = vadd.xlane.f32.xlu0 %v975
          %v977 = vpop.xlane.xlu0 %976
          %v978 = vadd.f32 %v956, %v957
          %979 = vadd.xlane.f32.xlu0 %v978
          %v980 = vpop.xlane.xlu0 %979
          %v981 = vadd.f32 %v958, %v959
          %982 = vadd.xlane.f32.xlu0 %v981
          %v983 = vpop.xlane.xlu0 %982
          %v984 = vrcp.pop 256.0
          %v985 = vmul.f32 %v962, %v984
          %v986 = vmul.f32 %v965, %v984
          %v987 = vmul.f32 %v968, %v984
          %v988 = vmul.f32 %v971, %v984
          %v989 = vmul.f32 %v974, %v984
          %v990 = vmul.f32 %v977, %v984
          %v991 = vmul.f32 %v980, %v984
          %v992 = vmul.f32 %v983, %v984
          %v993 = vsub.f32 %v944, %v985
          %v994 = vsub.f32 %v945, %v985
          %v995 = vsub.f32 %v946, %v986
          %v996 = vsub.f32 %v947, %v986
          %v997 = vsub.f32 %v948, %v987
          %v998 = vsub.f32 %v949, %v987
          %v999 = vsub.f32 %v950, %v988
          %v1000 = vsub.f32 %v951, %v988
          %v1001 = vsub.f32 %v952, %v989
          %v1002 = vsub.f32 %v953, %v989
          %v1003 = vsub.f32 %v954, %v990
          %v1004 = vsub.f32 %v955, %v990
          %v1005 = vsub.f32 %v956, %v991
          %v1006 = vsub.f32 %v957, %v991
          %v1007 = vsub.f32 %v958, %v992
          %v1008 = vsub.f32 %v959, %v992
          %v1009 = vmul.f32 %v993, %v993
          %v1010 = vmul.f32 %v994, %v994
          %v1011 = vmul.f32 %v995, %v995
          %v1012 = vmul.f32 %v996, %v996
          %v1013 = vmul.f32 %v997, %v997
          %v1014 = vmul.f32 %v998, %v998
          %v1015 = vmul.f32 %v999, %v999
          %v1016 = vmul.f32 %v1000, %v1000
          %v1017 = vmul.f32 %v1001, %v1001
          %v1018 = vmul.f32 %v1002, %v1002
          %v1019 = vmul.f32 %v1003, %v1003
          %v1020 = vmul.f32 %v1004, %v1004
          %v1021 = vmul.f32 %v1005, %v1005
          %v1022 = vmul.f32 %v1006, %v1006
          %v1023 = vmul.f32 %v1007, %v1007
          %v1024 = vmul.f32 %v1008, %v1008
          %v1025 = vadd.f32 %v1009, %v1010
          %1026 = vadd.xlane.f32.xlu0 %v1025
          %v1027 = vpop.xlane.xlu0 %1026
          %v1028 = vadd.f32 %v1011, %v1012
          %1029 = vadd.xlane.f32.xlu0 %v1028
          %v1030 = vpop.xlane.xlu0 %1029
          %v1031 = vadd.f32 %v1013, %v1014
          %1032 = vadd.xlane.f32.xlu0 %v1031
          %v1033 = vpop.xlane.xlu0 %1032
          %v1034 = vadd.f32 %v1015, %v1016
          %1035 = vadd.xlane.f32.xlu0 %v1034
          %v1036 = vpop.xlane.xlu0 %1035
          %v1037 = vadd.f32 %v1017, %v1018
          %1038 = vadd.xlane.f32.xlu0 %v1037
          %v1039 = vpop.xlane.xlu0 %1038
          %v1040 = vadd.f32 %v1019, %v1020
          %1041 = vadd.xlane.f32.xlu0 %v1040
          %v1042 = vpop.xlane.xlu0 %1041
          %v1043 = vadd.f32 %v1021, %v1022
          %1044 = vadd.xlane.f32.xlu0 %v1043
          %v1045 = vpop.xlane.xlu0 %1044
          %v1046 = vadd.f32 %v1023, %v1024
          %1047 = vadd.xlane.f32.xlu0 %v1046
          %v1048 = vpop.xlane.xlu0 %1047
          %v1049 = vmul.f32 %v1027, %v984
          %v1050 = vmul.f32 %v1030, %v984
          %v1051 = vmul.f32 %v1033, %v984
          %v1052 = vmul.f32 %v1036, %v984
          %v1053 = vmul.f32 %v1039, %v984
          %v1054 = vmul.f32 %v1042, %v984
          %v1055 = vmul.f32 %v1045, %v984
          %v1056 = vmul.f32 %v1048, %v984
          %v1057 = vadd.f32 %v1049, 1e-05
          %v1058 = vadd.f32 %v1050, 1e-05
          %v1059 = vadd.f32 %v1051, 1e-05
          %v1060 = vadd.f32 %v1052, 1e-05
          %v1061 = vadd.f32 %v1053, 1e-05
          %v1062 = vadd.f32 %v1054, 1e-05
          %v1063 = vadd.f32 %v1055, 1e-05
          %v1064 = vadd.f32 %v1056, 1e-05
          %v1065 = vrsqrt.pop %v1057
          %v1066 = vrsqrt.pop %v1058
          %v1067 = vrsqrt.pop %v1059
          %v1068 = vrsqrt.pop %v1060
          %v1069 = vrsqrt.pop %v1061
          %v1070 = vrsqrt.pop %v1062
          %v1071 = vrsqrt.pop %v1063
          %v1072 = vrsqrt.pop %v1064
          %v1073 = vmul.f32 %v993, %v1065
          %v1074 = vmul.f32 %v994, %v1065
          %v1075 = vmul.f32 %v995, %v1066
          %v1076 = vmul.f32 %v996, %v1066
          %v1077 = vmul.f32 %v997, %v1067
          %v1078 = vmul.f32 %v998, %v1067
          %v1079 = vmul.f32 %v999, %v1068
          %v1080 = vmul.f32 %v1000, %v1068
          %v1081 = vmul.f32 %v1001, %v1069
          %v1082 = vmul.f32 %v1002, %v1069
          %v1083 = vmul.f32 %v1003, %v1070
          %v1084 = vmul.f32 %v1004, %v1070
          %v1085 = vmul.f32 %v1005, %v1071
          %v1086 = vmul.f32 %v1006, %v1071
          %v1087 = vmul.f32 %v1007, %v1072
          %v1088 = vmul.f32 %v1008, %v1072
          %v1089 = vld [vmem:[%s3] sm:$0x3]
          %v1091 = vlaneseq
          %v1092 = vshrl.u32 %v1091, 7
          %v1093 = vsub.s32 0, %v1092
          %v1094 = vrot.slane %v1089, %v1093
          %v1095 = vlaneseq
          %v1096 = vshrl.u32 %v1095, 7
          %v1097 = vsub.s32 1, %v1096
          %v1098 = vrot.slane %v1089, %v1097
          %v1101 = vmul.f32 %v1073, %v1094
          %v1102 = vmul.f32 %v1074, %v1098
          %v1103 = vmul.f32 %v1075, %v1094
          %v1104 = vmul.f32 %v1076, %v1098
          %v1105 = vmul.f32 %v1077, %v1094
          %v1106 = vmul.f32 %v1078, %v1098
          %v1107 = vmul.f32 %v1079, %v1094
          %v1108 = vmul.f32 %v1080, %v1098
          %v1109 = vmul.f32 %v1081, %v1094
          %v1110 = vmul.f32 %v1082, %v1098
          %v1111 = vmul.f32 %v1083, %v1094
          %v1112 = vmul.f32 %v1084, %v1098
          %v1113 = vmul.f32 %v1085, %v1094
          %v1114 = vmul.f32 %v1086, %v1098
          %v1115 = vmul.f32 %v1087, %v1094
          %v1116 = vmul.f32 %v1088, %v1098
          %v1117 = vld [vmem:[%s4] sm:$0x3]
          %v1119 = vlaneseq
          %v1120 = vshrl.u32 %v1119, 7
          %v1121 = vsub.s32 0, %v1120
          %v1122 = vrot.slane %v1117, %v1121
          %v1123 = vlaneseq
          %v1124 = vshrl.u32 %v1123, 7
          %v1125 = vsub.s32 1, %v1124
          %v1126 = vrot.slane %v1117, %v1125
          %v1129 = vadd.f32 %v1101, %v1122
          %v1130 = vadd.f32 %v1102, %v1126
          %v1131 = vadd.f32 %v1103, %v1122
          %v1132 = vadd.f32 %v1104, %v1126
          %v1133 = vadd.f32 %v1105, %v1122
          %v1134 = vadd.f32 %v1106, %v1126
          %v1135 = vadd.f32 %v1107, %v1122
          %v1136 = vadd.f32 %v1108, %v1126
          %v1137 = vadd.f32 %v1109, %v1122
          %v1138 = vadd.f32 %v1110, %v1126
          %v1139 = vadd.f32 %v1111, %v1122
          %v1140 = vadd.f32 %v1112, %v1126
          %v1141 = vadd.f32 %v1113, %v1122
          %v1142 = vadd.f32 %v1114, %v1126
          %v1143 = vadd.f32 %v1115, %v1122
          %v1144 = vadd.f32 %v1116, %v1126
          %v1145 = vld [vmem:[%s338] sm:$0xff]
          %v1146 = vld [vmem:[%s338 + $0x8] sm:$0xff]
          %v1147 = vld [vmem:[%s338 + $0x10] sm:$0xff]
          %v1148 = vld [vmem:[%s338 + $0x18] sm:$0xff]
          %v1149 = vld [vmem:[%s338 + $0x20] sm:$0xff]
          %v1150 = vld [vmem:[%s338 + $0x28] sm:$0xff]
          %v1151 = vld [vmem:[%s338 + $0x30] sm:$0xff]
          %v1152 = vld [vmem:[%s338 + $0x38] sm:$0xff]
          %v1153 = vld [vmem:[%s338 + $0x40] sm:$0xff]
          %v1154 = vld [vmem:[%s338 + $0x48] sm:$0xff]
          %v1155 = vld [vmem:[%s338 + $0x50] sm:$0xff]
          %v1156 = vld [vmem:[%s338 + $0x58] sm:$0xff]
          %v1157 = vld [vmem:[%s338 + $0x60] sm:$0xff]
          %v1158 = vld [vmem:[%s338 + $0x68] sm:$0xff]
          %v1159 = vld [vmem:[%s338 + $0x70] sm:$0xff]
          %v1160 = vld [vmem:[%s338 + $0x78] sm:$0xff]
          %v1161 = vadd.f32 %v1129, %v1145
          %v1162 = vadd.f32 %v1130, %v1146
          %v1163 = vadd.f32 %v1131, %v1147
          %v1164 = vadd.f32 %v1132, %v1148
          %v1165 = vadd.f32 %v1133, %v1149
          %v1166 = vadd.f32 %v1134, %v1150
          %v1167 = vadd.f32 %v1135, %v1151
          %v1168 = vadd.f32 %v1136, %v1152
          %v1169 = vadd.f32 %v1137, %v1153
          %v1170 = vadd.f32 %v1138, %v1154
          %v1171 = vadd.f32 %v1139, %v1155
          %v1172 = vadd.f32 %v1140, %v1156
          %v1173 = vadd.f32 %v1141, %v1157
          %v1174 = vadd.f32 %v1142, %v1158
          %v1175 = vadd.f32 %v1143, %v1159
          %v1176 = vadd.f32 %v1144, %v1160
          %v1177 = vpack.c.bf16 %v1163, %v1161
          %v1178 = vpack.c.bf16 %v1164, %v1162
          %v1179 = vpack.c.bf16 %v1167, %v1165
          %v1180 = vpack.c.bf16 %v1168, %v1166
          %v1181 = vpack.c.bf16 %v1171, %v1169
          %v1182 = vpack.c.bf16 %v1172, %v1170
          %v1183 = vpack.c.bf16 %v1175, %v1173
          %v1184 = vpack.c.bf16 %v1176, %v1174
          %v1193 = vunpack.c.l.b16 %v1177
          %v1194 = vunpack.c.l.b16 %v1178
          %v1195 = vunpack.c.h.b16 %v1177
          %v1196 = vunpack.c.h.b16 %v1178
          %v1197 = vunpack.c.l.b16 %v1179
          %v1198 = vunpack.c.l.b16 %v1180
          %v1199 = vunpack.c.h.b16 %v1179
          %v1200 = vunpack.c.h.b16 %v1180
          %v1201 = vunpack.c.l.b16 %v1181
          %v1202 = vunpack.c.l.b16 %v1182
          %v1203 = vunpack.c.h.b16 %v1181
          %v1204 = vunpack.c.h.b16 %v1182
          %v1205 = vunpack.c.l.b16 %v1183
          %v1206 = vunpack.c.l.b16 %v1184
          %v1207 = vunpack.c.h.b16 %v1183
          %v1208 = vunpack.c.h.b16 %v1184
          %v1209 = vpack.c.b16 %v1194, %v1193
          %v1210 = vpack.c.b16 %v1196, %v1195
          %v1211 = vpack.c.b16 %v1198, %v1197
          %v1212 = vpack.c.b16 %v1200, %v1199
          %v1213 = vpack.c.b16 %v1202, %v1201
          %v1214 = vpack.c.b16 %v1204, %v1203
          %v1215 = vpack.c.b16 %v1206, %v1205
          %v1216 = vpack.c.b16 %v1208, %v1207
          %1225 = vst [vmem:[%s375] sm:$0xff] %v1209
          %1226 = vst [vmem:[%s375 + $0x8] sm:$0xff] %v1210
          %1227 = vst [vmem:[%s375 + $0x10] sm:$0xff] %v1211
          %1228 = vst [vmem:[%s375 + $0x18] sm:$0xff] %v1212
          %1229 = vst [vmem:[%s375 + $0x20] sm:$0xff] %v1213
          %1230 = vst [vmem:[%s375 + $0x28] sm:$0xff] %v1214
          %1231 = vst [vmem:[%s375 + $0x30] sm:$0xff] %v1215
          %1232 = vst [vmem:[%s375 + $0x38] sm:$0xff] %v1216
        $region64: #{tpu_custom_call.1} parent=43 // pred_fallthru
          _
        %s1233 = sand.u32 %s203, 1
        %s1234 = scalar_lea.sflag [#allocation5], %s1233
        %s1235 = sand.u32 %s203, 1
        %s1236 = smul.addr %s1235, 64
        %s1237 = scalar_lea.vmem [#allocation9], %s1236
        // Predicated region
        $region65: #{tpu_custom_call.1} parent=43 // pred_check
          %p1238 = pneg %p213
        $region66: #{tpu_custom_call.1} parent=43 // pred_check_branch
          %1240 = sbr.rel (%p1238) target = $region68
        $region67: #{tpu_custom_call.1} parent=43 // pred_region
          %s1241 = smul.u32 8, %s29
          %s1242 = smul.u32 2, %s30
          %s1244 = ssub.s32 1024, 1024
          %1245 = vsyncadd %s1234, %s1244
          %s1246 = smul.addr %s1241, 2
          %s1247 = sadd.s32 %s1242, %s1246
          %s1248 = smul.addr %s1247, 64
          %s1249 = scalar_lea.hbm %s6, %s1248
          %s1250 = sshll.u32 %s1237, 4
          %s1251 = int_to_ptr.vmem [resolvable:$true] %s1250
          %1256 = dma.vmem_to_hbm [thread:$0]  %s1251, 1024, %s1249, %s1234, 128, 128, 8
        $region68: #{tpu_custom_call.1} parent=43 // pred_fallthru
          _
      $region44: #{tpu_custom_call.1} parent=5 // pred_fallthru
        _
      %p1257 = scmp.le.s32.totalorder 2, %s19
      // Predicated region
      $region69: #{tpu_custom_call.1} parent=5 // pred_check
        %p1258 = pneg %p1257
      $region70: #{tpu_custom_call.1} parent=5 // pred_check_branch
        %1260 = sbr.rel (%p1258) target = $region72
      $region71: #{tpu_custom_call.1} parent=5 // pred_region
        %s1261 = ssub.s32 %s19, 2
        // Predicated region
        $region73: #{tpu_custom_call.1} parent=71 // pred_check
          %p1262 = pneg %p219
        $region74: #{tpu_custom_call.1} parent=71 // pred_check_branch
          %1264 = sbr.rel (%p1262) target = $region76
        $region75: #{tpu_custom_call.1} parent=71 // pred_region
          %s1265 = sand.u32 %s204, 1
          %s1266 = scalar_lea.sflag [#allocation5], %s1265
          %s1267 = sand.u32 %s204, 1
          %s1268 = smul.addr %s1267, 64
          %s1269 = scalar_lea.vmem [#allocation9], %s1268
          %1270 = dma.done %s1266, 1024
        $region76: #{tpu_custom_call.1} parent=71 // pred_fallthru
          _
      $region72: #{tpu_custom_call.1} parent=5 // pred_fallthru
        _
    $region6: #{tpu_custom_call.1} parent=1 // loop_footer
      %s23 = sadd.s32 1, %s19
    $region7: #{tpu_custom_call.1} parent=1 // loop_footer_branch
      %18 = sbr.rel target = $region3
    $region8: #{tpu_custom_call.1} parent=1 // loop_exit
      _
    %1271 = vsyncpa [#allocation4], 1
    %s1272 = scalar_lea.sflag [#allocation4], 1
    %1273 = vsyncpa %s1272, 1
    %1274 = vsyncpa [#allocation7], 1
    %1275 = vsyncpa [#allocation5], 1
    %s1276 = scalar_lea.sflag [#allocation5], 1
    %1277 = vsyncpa %s1276, 1

</llo_original>
